<compile_context>
chip_gen: v7x
topology: tpu7x:2x2x1
jax: 0.10.0
libtpu: 0.0.40
codegen_flags: <defaults>
</compile_context>

<pallas_src>
import functools

import jax
import jax.numpy as jnp
from jax.experimental import pallas as pl
from jax.experimental.pallas import tpu as pltpu

# ----------------------------- model config (small) -----------------------------
IN_C = 3
IMG = 32
STEM_C = 16
BLOCK_C = 32
GROUPS = 4
SE_HIDDEN = 8
NUM_CLASSES = 10

_VMEM_LIMIT = 32 * 1024 * 1024  # >= v5e default, == v7x scoped default


def _num_tensorcores():
    """2 TensorCores per chip on v7x, 1 on v5e/v6e."""
    try:
        kind = jax.devices()[0].device_kind.lower()
    except Exception:  # pragma: no cover - defensive
        return 1
    return 2 if "7" in kind else 1


# ----------------------------- Pallas kernels -----------------------------------
def _stem_block_head_kernel(cols_ref, sw_ref, sb_ref, bw_ref, bb_ref, o_ref):
    """Fused: stem conv(im2col matmul)+BN+ReLU -> [conv1(1x1)+BN+ReLU | shortcut 1x1+BN].

    bf16 operands, f32 accumulation; output bf16 [tm, 2*BLOCK_C] (conv1 half ReLU'd)."""
    h = jnp.dot(cols_ref[...], sw_ref[...], preferred_element_type=jnp.float32)
    h = jnp.maximum(h + sb_ref[...], 0.0)                              # stem act, f32
    z = jnp.dot(h.astype(jnp.bfloat16), bw_ref[...],
                preferred_element_type=jnp.float32)
    z = z + bb_ref[...]                                                # [tm, 2*BLOCK_C]
    # ReLU only on the conv1 half (first BLOCK_C lanes); shortcut half stays linear.
    lane = jax.lax.broadcasted_iota(jnp.int32, z.shape, 1)
    z = jnp.where(lane < BLOCK_C, jnp.maximum(z, 0.0), z)
    o_ref[...] = z.astype(o_ref.dtype)


def stem_block_head(cols, stem_w, stem_b, b1sc_w, b1sc_b):
    """cols: [M, 9*IN_C] bf16 -> [M, 2*BLOCK_C] bf16 (conv1 | shortcut, full resolution)."""
    M, K = cols.shape
    n_out = b1sc_w.shape[1]
    cores = _num_tensorcores()
    tm = M // 2 if (cores == 2 and M % 16 == 0) else M   # split across v7x's 2 TCs
    grid = (M // tm,)
    return pl.pallas_call(
        _stem_block_head_kernel,
        out_shape=jax.ShapeDtypeStruct((M, n_out), jnp.bfloat16),
        grid=grid,
        in_specs=[
            pl.BlockSpec((tm, K), lambda i: (i, 0)),
            pl.BlockSpec((K, STEM_C), lambda i: (0, 0)),
            pl.BlockSpec((1, STEM_C), lambda i: (0, 0)),
            pl.BlockSpec((STEM_C, n_out), lambda i: (0, 0)),
            pl.BlockSpec((1, n_out), lambda i: (0, 0)),
        ],
        out_specs=pl.BlockSpec((tm, n_out), lambda i: (i, 0)),
        compiler_params=pltpu.CompilerParams(
            dimension_semantics=("parallel",),
            vmem_limit_bytes=_VMEM_LIMIT),
    )(cols, stem_w, stem_b.reshape(1, STEM_C), b1sc_w, b1sc_b.reshape(1, n_out))


def _block_tail_kernel(cols2_ref, sc_ref, b2w_ref, b2b_ref,
                       se1w_ref, se1b_ref, se2w_ref, se2b_ref,
                       b3w_ref, b3b_ref, clsw_ref, clsb_ref, o_ref, *, n, hw):
    """Fused: grouped 3x3 conv (block-diag matmul)+BN+ReLU -> SE -> conv3(1x1)+BN ->
    residual add+ReLU -> head GAP -> classifier.  Everything VMEM-resident."""
    # grouped conv as one block-diagonal matmul
    y = jnp.dot(cols2_ref[...], b2w_ref[...], preferred_element_type=jnp.float32)
    y = jnp.maximum(y + b2b_ref[...], 0.0)                              # [n*hw, C] f32

    # SE squeeze: per-image spatial mean (sublane reduction on the XLU)
    means = jnp.concatenate(
        [jnp.mean(y[i * hw:(i + 1) * hw, :], axis=0, keepdims=True) for i in range(n)],
        axis=0)                                                         # [n, C]
    s = jnp.dot(means.astype(jnp.bfloat16), se1w_ref[...],
                preferred_element_type=jnp.float32) + se1b_ref[...]
    s = jnp.maximum(s, 0.0)
    s = jnp.dot(s.astype(jnp.bfloat16), se2w_ref[...],
                preferred_element_type=jnp.float32) + se2b_ref[...]
    s = jax.nn.sigmoid(s)                                               # [n, C] gates

    # SE excite: per-image broadcast multiply (VPU)
    yg = jnp.concatenate(
        [y[i * hw:(i + 1) * hw, :] * s[i:i + 1, :] for i in range(n)], axis=0)

    # conv3 1x1 (+folded BN), residual add, ReLU
    y3 = jnp.dot(yg.astype(jnp.bfloat16), b3w_ref[...],
                 preferred_element_type=jnp.float32) + b3b_ref[...]
    yr = jnp.maximum(y3 + sc_ref[...].astype(jnp.float32), 0.0)         # [n*hw, C]

    # head: global average pool + linear classifier
    pooled = jnp.concatenate(
        [jnp.mean(yr[i * hw:(i + 1) * hw, :], axis=0, keepdims=True) for i in range(n)],
        axis=0)                                                         # [n, C]
    logits = jnp.dot(pooled.astype(jnp.bfloat16), clsw_ref[...],
                     preferred_element_type=jnp.float32) + clsb_ref[...]
    o_ref[...] = logits.astype(o_ref.dtype)


def block_tail_logits(cols2, sc2d, p, n, hw):
    """cols2: [n*hw, 9*C] bf16, sc2d: [n*hw, C] bf16 -> logits [n, NUM_CLASSES] f32."""
    rows, kk = cols2.shape
    c = sc2d.shape[1]
    seh = p["se1_w"].shape[1]
    ncls = p["cls_w"].shape[1]
    args = (
        cols2, sc2d,
        p["b2_w"], p["b2_b"].reshape(1, c),
        p["se1_w"], p["se1_b"].reshape(1, seh),
        p["se2_w"], p["se2_b"].reshape(1, c),
        p["b3_w"], p["b3_b"].reshape(1, c),
        p["cls_w"], p["cls_b"].reshape(1, ncls),
    )
    in_specs = [
        pl.BlockSpec((rows, kk), lambda i: (0, 0)),
        pl.BlockSpec((rows, c), lambda i: (0, 0)),
        pl.BlockSpec((kk, c), lambda i: (0, 0)),
        pl.BlockSpec((1, c), lambda i: (0, 0)),
        pl.BlockSpec((c, seh), lambda i: (0, 0)),
        pl.BlockSpec((1, seh), lambda i: (0, 0)),
        pl.BlockSpec((seh, c), lambda i: (0, 0)),
        pl.BlockSpec((1, c), lambda i: (0, 0)),
        pl.BlockSpec((c, c), lambda i: (0, 0)),
        pl.BlockSpec((1, c), lambda i: (0, 0)),
        pl.BlockSpec((c, ncls), lambda i: (0, 0)),
        pl.BlockSpec((1, ncls), lambda i: (0, 0)),
    ]
    return pl.pallas_call(
        functools.partial(_block_tail_kernel, n=n, hw=hw),
        out_shape=jax.ShapeDtypeStruct((n, ncls), jnp.float32),
        grid=(1,),
        in_specs=in_specs,
        out_specs=pl.BlockSpec((n, ncls), lambda i: (0, 0)),
        compiler_params=pltpu.CompilerParams(
            dimension_semantics=("arbitrary",),
            vmem_limit_bytes=_VMEM_LIMIT),
    )(*args)


# ----------------------------- plain-JAX glue ------------------------------------
def im2col(x, kh, kw, stride, pad):
    """x: [N,H,W,C] -> [N,Ho,Wo, kh*kw*C] patch matrix (tap-major, channel-inner)."""
    n, h, w, c = x.shape
    xp = jnp.pad(x, ((0, 0), (pad, pad), (pad, pad), (0, 0)))
    ho = (h + 2 * pad - kh) // stride + 1
    wo = (w + 2 * pad - kw) // stride + 1
    cols = []
    for i in range(kh):
        for j in range(kw):
            cols.append(xp[:, i:i + ho * stride:stride, j:j + wo * stride:stride, :])
    return jnp.concatenate(cols, axis=-1)


def conv_w(key, cout, cin, kh, kw):
    fan_in = cin * kh * kw
    return jax.random.normal(key, (cout, cin, kh, kw), jnp.float32) * (2.0 / fan_in) ** 0.5


def to_mat(w):
    """PyTorch conv weight [Cout,Cin,kh,kw] -> matmul weight [kh*kw*Cin, Cout]."""
    cout, cin, kh, kw = w.shape
    return jnp.transpose(w, (2, 3, 1, 0)).reshape(kh * kw * cin, cout)


def bn_params(key, c):
    k1, k2, k3, k4 = jax.random.split(key, 4)
    gamma = 1.0 + 0.1 * jax.random.normal(k1, (c,), jnp.float32)
    beta = 0.1 * jax.random.normal(k2, (c,), jnp.float32)
    mean = 0.1 * jax.random.normal(k3, (c,), jnp.float32)
    var = 1.0 + 0.1 * jax.random.uniform(k4, (c,), jnp.float32)
    return gamma, beta, mean, var


def fold_bn(w_mat, bn, eps=1e-5):
    gamma, beta, mean, var = bn
    scale = gamma / jnp.sqrt(var + eps)
    return w_mat * scale[None, :], beta - mean * scale


def init_params(key):
    """Deterministic synthetic weights (f32 master copy, BN pre-folded)."""
    ks = jax.random.split(key, 16)
    p = {}
    p["stem_w"], p["stem_b"] = fold_bn(to_mat(conv_w(ks[0], STEM_C, IN_C, 3, 3)),
                                       bn_params(ks[1], STEM_C))
    p["sc_w"], p["sc_b"] = fold_bn(to_mat(conv_w(ks[2], BLOCK_C, STEM_C, 1, 1)),
                                   bn_params(ks[3], BLOCK_C))
    p["b1_w"], p["b1_b"] = fold_bn(to_mat(conv_w(ks[4], BLOCK_C, STEM_C, 1, 1)),
                                   bn_params(ks[5], BLOCK_C))
    # fused conv1 | shortcut weight for the head kernel
    p["b1sc_w"] = jnp.concatenate([p["b1_w"], p["sc_w"]], axis=1)     # [STEM_C, 2*BLOCK_C]
    p["b1sc_b"] = jnp.concatenate([p["b1_b"], p["sc_b"]], axis=0)
    # grouped 3x3/s2 conv + BN, packed as ONE block-diagonal weight [9*C, C]
    cg = BLOCK_C // GROUPS
    wg = conv_w(ks[6], BLOCK_C, cg, 3, 3)                             # [Cout, Cin/groups, 3, 3]
    gamma, beta, mean, var = bn_params(ks[7], BLOCK_C)
    wbig = jnp.zeros((9, BLOCK_C, BLOCK_C), jnp.float32)
    bbig = []
    for gi in range(GROUPS):
        sl = slice(gi * cg, (gi + 1) * cg)
        wf, bf = fold_bn(to_mat(wg[sl]), (gamma[sl], beta[sl], mean[sl], var[sl]))
        wbig = wbig.at[:, sl, sl].set(wf.reshape(9, cg, cg))
        bbig.append(bf)
    p["b2_w"] = wbig.reshape(9 * BLOCK_C, BLOCK_C)
    p["b2_b"] = jnp.concatenate(bbig)
    # squeeze-excitation FCs
    p["se1_w"] = jax.random.normal(ks[8], (BLOCK_C, SE_HIDDEN), jnp.float32) * (2.0 / BLOCK_C) ** 0.5
    p["se1_b"] = jnp.full((SE_HIDDEN,), 0.01, jnp.float32)
    p["se2_w"] = jax.random.normal(ks[9], (SE_HIDDEN, BLOCK_C), jnp.float32) * (2.0 / SE_HIDDEN) ** 0.5
    p["se2_b"] = jnp.zeros((BLOCK_C,), jnp.float32)
    # block conv3: 1x1 + BN
    p["b3_w"], p["b3_b"] = fold_bn(to_mat(conv_w(ks[10], BLOCK_C, BLOCK_C, 1, 1)),
                                   bn_params(ks[11], BLOCK_C))
    # classifier head
    p["cls_w"] = jax.random.normal(ks[12], (BLOCK_C, NUM_CLASSES), jnp.float32) * (1.0 / BLOCK_C) ** 0.5
    p["cls_b"] = jnp.zeros((NUM_CLASSES,), jnp.float32)
    return p


def to_device_params(p):
    """bf16 weights (MXU operands), f32 biases (epilogue adds)."""
    return {k: (v.astype(jnp.bfloat16) if k.endswith("_w") else v) for k, v in p.items()}


# ----------------------------- forward (== wrapper.forward) ----------------------
def regnet_logits(dp, x_nchw):
    """Equivalent of HuggingfaceToTensorModelWrapper.forward: model(x).logits."""
    x = jnp.transpose(x_nchw, (0, 2, 3, 1)).astype(jnp.bfloat16)      # NCHW -> NHWC
    n = x.shape[0]

    # Launch A: stem conv + block conv1 + shortcut conv, one pallas_call.
    cols = im2col(x, 3, 3, 2, 1)                                      # [N,16,16,27] bf16
    ho, wo = cols.shape[1], cols.shape[2]
    z = stem_block_head(cols.reshape(n * ho * wo, -1),
                        dp["stem_w"], dp["stem_b"],
                        dp["b1sc_w"], dp["b1sc_b"])                   # [N*HW, 64] bf16
    z = z.reshape(n, ho, wo, 2 * BLOCK_C)
    y1 = z[..., :BLOCK_C]                                             # conv1 act (ReLU'd)
    sc = z[:, ::2, ::2, BLOCK_C:]                                     # 1x1/s2 shortcut
    hg, wg_ = sc.shape[1], sc.shape[2]

    # Launch B: grouped conv + SE + conv3 + residual + GAP + classifier, one pallas_call.
    cols2 = im2col(y1, 3, 3, 2, 1)                                    # [N,8,8,288] bf16
    logits = block_tail_logits(cols2.reshape(n * hg * wg_, -1),
                               sc.reshape(n * hg * wg_, BLOCK_C),
                               dp, n, hg * wg_)
    return logits                                                     # [N, NUM_CLASSES] f32


# ----------------------------- pure-JAX f32 reference ----------------------------
def regnet_logits_ref(p, x_nchw):
    x = jnp.transpose(x_nchw, (0, 2, 3, 1)).astype(jnp.float32)
    n = x.shape[0]
    cols = im2col(x, 3, 3, 2, 1)
    ho, wo = cols.shape[1], cols.shape[2]
    h = jnp.maximum(cols.reshape(n * ho * wo, -1) @ p["stem_w"] + p["stem_b"], 0.0)
    h = h.reshape(n, ho, wo, STEM_C)
    y = jnp.maximum(h.reshape(-1, STEM_C) @ p["b1_w"] + p["b1_b"], 0.0)
    y = y.reshape(n, ho, wo, BLOCK_C)
    sc = h[:, ::2, ::2, :].reshape(-1, STEM_C) @ p["sc_w"] + p["sc_b"]
    cols2 = im2col(y, 3, 3, 2, 1)
    hg, wg_ = cols2.shape[1], cols2.shape[2]
    hw = hg * wg_
    y2 = jnp.maximum(cols2.reshape(n * hw, -1) @ p["b2_w"] + p["b2_b"], 0.0)
    y2i = y2.reshape(n, hw, BLOCK_C)
    s = jnp.mean(y2i, axis=1)
    s = jnp.maximum(s @ p["se1_w"] + p["se1_b"], 0.0)
    s = jax.nn.sigmoid(s @ p["se2_w"] + p["se2_b"])
    yg = (y2i * s[:, None, :]).reshape(-1, BLOCK_C)
    y3 = yg @ p["b3_w"] + p["b3_b"]
    yr = jnp.maximum(y3 + sc, 0.0)
    pooled = jnp.mean(yr.reshape(n, hw, BLOCK_C), axis=1)
    return pooled @ p["cls_w"] + p["cls_b"]


# ----------------------------- main ----------------------------------------------
if __name__ == "__main__":
    key = jax.random.PRNGKey(0)
    pkey, xkey = jax.random.split(key)
    params = init_params(pkey)
    dparams = to_device_params(params)
    x = jax.random.normal(xkey, (2, IN_C, IMG, IMG), jnp.float32)     # NCHW, PyTorch-style

    logits = jax.block_until_ready(jax.jit(lambda inp: regnet_logits(dparams, inp))(x))
    ref = jax.block_until_ready(jax.jit(lambda inp: regnet_logits_ref(params, inp))(x))

    assert logits.shape == (2, NUM_CLASSES), logits.shape
    assert logits.dtype == jnp.float32
    assert bool(jnp.all(jnp.isfinite(logits)))
    rel_err = float(jnp.max(jnp.abs(logits - ref)) / (jnp.max(jnp.abs(ref)) + 1e-6))
    assert rel_err < 0.15, f"mismatch vs f32 reference: rel-max err {rel_err}"
    print("KERNEL_OK")
</pallas_src>

<mosaic_0001>
module attributes {stable_mosaic.version = 11 : i64} {
  func.func @_stem_block_head_kernel(%arg0: i32, %arg1: memref<512x27xbf16, #tpu.memory_space<vmem>>, %arg2: memref<27x16xbf16, #tpu.memory_space<vmem>>, %arg3: memref<1x16xf32, #tpu.memory_space<vmem>>, %arg4: memref<16x64xbf16, #tpu.memory_space<vmem>>, %arg5: memref<1x64xf32, #tpu.memory_space<vmem>>, %arg6: memref<512x64xbf16, #tpu.memory_space<vmem>>) attributes {dimension_semantics = [#tpu.dimension_semantics<parallel>], iteration_bounds = array<i64: 1>, scalar_prefetch = 0 : i64, scratch_operands = 0 : i64, tpu.core_type = #tpu.core_type<tc>, window_params = [{transform_indices = @transform_0, window_bounds = array<i64: 512, 27>}, {pipeline_mode = #tpu.pipeline_mode<synchronous>, transform_indices = @transform_1, window_bounds = array<i64: 27, 16>}, {pipeline_mode = #tpu.pipeline_mode<synchronous>, transform_indices = @transform_2, window_bounds = array<i64: 1, 16>}, {pipeline_mode = #tpu.pipeline_mode<synchronous>, transform_indices = @transform_3, window_bounds = array<i64: 16, 64>}, {pipeline_mode = #tpu.pipeline_mode<synchronous>, transform_indices = @transform_4, window_bounds = array<i64: 1, 64>}, {transform_indices = @transform_5, window_bounds = array<i64: 512, 64>}]} {
    %c0 = arith.constant 0 : index
    %c0_0 = arith.constant 0 : index
    %0 = vector.load %arg1[%c0, %c0_0] : memref<512x27xbf16, #tpu.memory_space<vmem>>, vector<512x27xbf16>
    %c0_1 = arith.constant 0 : index
    %c0_2 = arith.constant 0 : index
    %1 = vector.load %arg2[%c0_1, %c0_2] : memref<27x16xbf16, #tpu.memory_space<vmem>>, vector<27x16xbf16>
    %cst = arith.constant dense<0.000000e+00> : vector<512x16xf32>
    %2 = tpu.matmul %0, %1, %cst {dimension_numbers = #tpu.dot_dimension_numbers<[1], [0], [0], [1], [0, 0, 1, 1], [], []>} : vector<512x27xbf16>, vector<27x16xbf16>, vector<512x16xf32> -> vector<512x16xf32>
    %c0_3 = arith.constant 0 : index
    %c0_4 = arith.constant 0 : index
    %3 = vector.load %arg3[%c0_3, %c0_4] : memref<1x16xf32, #tpu.memory_space<vmem>>, vector<1x16xf32>
    %4 = vector.broadcast %3 : vector<1x16xf32> to vector<512x16xf32>
    %5 = arith.addf %2, %4 : vector<512x16xf32>
    %cst_5 = arith.constant 0.000000e+00 : f32
    %6 = vector.broadcast %cst_5 : f32 to vector<512x16xf32>
    %7 = arith.maximumf %5, %6 : vector<512x16xf32>
    %8 = arith.truncf %7 : vector<512x16xf32> to vector<512x16xbf16>
    %c0_6 = arith.constant 0 : index
    %c0_7 = arith.constant 0 : index
    %9 = vector.load %arg4[%c0_6, %c0_7] : memref<16x64xbf16, #tpu.memory_space<vmem>>, vector<16x64xbf16>
    %cst_8 = arith.constant dense<0.000000e+00> : vector<512x64xf32>
    %10 = tpu.matmul %8, %9, %cst_8 {dimension_numbers = #tpu.dot_dimension_numbers<[1], [0], [0], [1], [0, 0, 1, 1], [], []>} : vector<512x16xbf16>, vector<16x64xbf16>, vector<512x64xf32> -> vector<512x64xf32>
    %c0_9 = arith.constant 0 : index
    %c0_10 = arith.constant 0 : index
    %11 = vector.load %arg5[%c0_9, %c0_10] : memref<1x64xf32, #tpu.memory_space<vmem>>, vector<1x64xf32>
    %12 = vector.broadcast %11 : vector<1x64xf32> to vector<512x64xf32>
    %13 = arith.addf %10, %12 : vector<512x64xf32>
    %14 = tpu.iota {dimensions = array<i32: 1>} : vector<512x64xi32>
    %c32_i32 = arith.constant 32 : i32
    %15 = vector.broadcast %c32_i32 : i32 to vector<512x64xi32>
    %16 = arith.cmpi slt, %14, %15 : vector<512x64xi32>
    %cst_11 = arith.constant 0.000000e+00 : f32
    %17 = vector.broadcast %cst_11 : f32 to vector<512x64xf32>
    %18 = arith.maximumf %13, %17 : vector<512x64xf32>
    %19 = arith.select %16, %18, %13 : vector<512x64xi1>, vector<512x64xf32>
    %20 = arith.truncf %19 : vector<512x64xf32> to vector<512x64xbf16>
    %c0_12 = arith.constant 0 : index
    %c0_13 = arith.constant 0 : index
    %21 = vector.load %arg6[%c0_12, %c0_13] : memref<512x64xbf16, #tpu.memory_space<vmem>>, vector<512x64xbf16>
    tpu.vector_store %arg6[%c0_12, %c0_13], %20 {strides = array<i32>} : memref<512x64xbf16, #tpu.memory_space<vmem>>, vector<512x64xbf16>,
    return
  }
  func.func @transform_0(%arg0: i32) -> (i32, i32) {
    %c0_i32 = arith.constant 0 : i32
    %c0_i32_0 = arith.constant 0 : i32
    return %arg0, %c0_i32 : i32, i32
  }
  func.func @transform_1(%arg0: i32) -> (i32, i32) {
    %c0_i32 = arith.constant 0 : i32
    %c0_i32_0 = arith.constant 0 : i32
    %c0_i32_1 = arith.constant 0 : i32
    return %c0_i32, %c0_i32_0 : i32, i32
  }
  func.func @transform_2(%arg0: i32) -> (i32, i32) {
    %c0_i32 = arith.constant 0 : i32
    %c0_i32_0 = arith.constant 0 : i32
    %c0_i32_1 = arith.constant 0 : i32
    return %c0_i32, %c0_i32_0 : i32, i32
  }
  func.func @transform_3(%arg0: i32) -> (i32, i32) {
    %c0_i32 = arith.constant 0 : i32
    %c0_i32_0 = arith.constant 0 : i32
    %c0_i32_1 = arith.constant 0 : i32
    return %c0_i32, %c0_i32_0 : i32, i32
  }
  func.func @transform_4(%arg0: i32) -> (i32, i32) {
    %c0_i32 = arith.constant 0 : i32
    %c0_i32_0 = arith.constant 0 : i32
    %c0_i32_1 = arith.constant 0 : i32
    return %c0_i32, %c0_i32_0 : i32, i32
  }
  func.func @transform_5(%arg0: i32) -> (i32, i32) {
    %c0_i32 = arith.constant 0 : i32
    %c0_i32_0 = arith.constant 0 : i32
    return %arg0, %c0_i32 : i32, i32
  }
}

module attributes {stable_mosaic.version = 11 : i64} {
  func.func @_block_tail_kernel(%arg0: i32, %arg1: memref<128x288xbf16, #tpu.memory_space<vmem>>, %arg2: memref<128x32xbf16, #tpu.memory_space<vmem>>, %arg3: memref<288x32xbf16, #tpu.memory_space<vmem>>, %arg4: memref<1x32xf32, #tpu.memory_space<vmem>>, %arg5: memref<32x8xbf16, #tpu.memory_space<vmem>>, %arg6: memref<1x8xf32, #tpu.memory_space<vmem>>, %arg7: memref<8x32xbf16, #tpu.memory_space<vmem>>, %arg8: memref<1x32xf32, #tpu.memory_space<vmem>>, %arg9: memref<32x32xbf16, #tpu.memory_space<vmem>>, %arg10: memref<1x32xf32, #tpu.memory_space<vmem>>, %arg11: memref<32x10xbf16, #tpu.memory_space<vmem>>, %arg12: memref<1x10xf32, #tpu.memory_space<vmem>>, %arg13: memref<2x10xf32, #tpu.memory_space<vmem>>) attributes {dimension_semantics = [#tpu.dimension_semantics<arbitrary>], iteration_bounds = array<i64: 1>, scalar_prefetch = 0 : i64, scratch_operands = 0 : i64, tpu.core_type = #tpu.core_type<tc>, window_params = [{pipeline_mode = #tpu.pipeline_mode<synchronous>, transform_indices = @transform_0, window_bounds = array<i64: 128, 288>}, {pipeline_mode = #tpu.pipeline_mode<synchronous>, transform_indices = @transform_1, window_bounds = array<i64: 128, 32>}, {pipeline_mode = #tpu.pipeline_mode<synchronous>, transform_indices = @transform_2, window_bounds = array<i64: 288, 32>}, {pipeline_mode = #tpu.pipeline_mode<synchronous>, transform_indices = @transform_3, window_bounds = array<i64: 1, 32>}, {pipeline_mode = #tpu.pipeline_mode<synchronous>, transform_indices = @transform_4, window_bounds = array<i64: 32, 8>}, {pipeline_mode = #tpu.pipeline_mode<synchronous>, transform_indices = @transform_5, window_bounds = array<i64: 1, 8>}, {pipeline_mode = #tpu.pipeline_mode<synchronous>, transform_indices = @transform_6, window_bounds = array<i64: 8, 32>}, {pipeline_mode = #tpu.pipeline_mode<synchronous>, transform_indices = @transform_7, window_bounds = array<i64: 1, 32>}, {pipeline_mode = #tpu.pipeline_mode<synchronous>, transform_indices = @transform_8, window_bounds = array<i64: 32, 32>}, {pipeline_mode = #tpu.pipeline_mode<synchronous>, transform_indices = @transform_9, window_bounds = array<i64: 1, 32>}, {pipeline_mode = #tpu.pipeline_mode<synchronous>, transform_indices = @transform_10, window_bounds = array<i64: 32, 10>}, {pipeline_mode = #tpu.pipeline_mode<synchronous>, transform_indices = @transform_11, window_bounds = array<i64: 1, 10>}, {pipeline_mode = #tpu.pipeline_mode<synchronous>, transform_indices = @transform_12, window_bounds = array<i64: 2, 10>}]} {
    %c0 = arith.constant 0 : index
    %c0_0 = arith.constant 0 : index
    %0 = vector.load %arg1[%c0, %c0_0] : memref<128x288xbf16, #tpu.memory_space<vmem>>, vector<128x288xbf16>
    %c0_1 = arith.constant 0 : index
    %c0_2 = arith.constant 0 : index
    %1 = vector.load %arg3[%c0_1, %c0_2] : memref<288x32xbf16, #tpu.memory_space<vmem>>, vector<288x32xbf16>
    %cst = arith.constant dense<0.000000e+00> : vector<128x32xf32>
    %2 = tpu.matmul %0, %1, %cst {dimension_numbers = #tpu.dot_dimension_numbers<[1], [0], [0], [1], [0, 0, 1, 1], [], []>} : vector<128x288xbf16>, vector<288x32xbf16>, vector<128x32xf32> -> vector<128x32xf32>
    %c0_3 = arith.constant 0 : index
    %c0_4 = arith.constant 0 : index
    %3 = vector.load %arg4[%c0_3, %c0_4] : memref<1x32xf32, #tpu.memory_space<vmem>>, vector<1x32xf32>
    %4 = vector.broadcast %3 : vector<1x32xf32> to vector<128x32xf32>
    %5 = arith.addf %2, %4 : vector<128x32xf32>
    %cst_5 = arith.constant 0.000000e+00 : f32
    %6 = vector.broadcast %cst_5 : f32 to vector<128x32xf32>
    %7 = arith.maximumf %5, %6 : vector<128x32xf32>
    %8 = vector.extract_strided_slice %7 {offsets = [0, 0], sizes = [64, 32], strides = [1, 1]} : vector<128x32xf32> to vector<64x32xf32>
    %cst_6 = arith.constant dense<0.000000e+00> : vector<32xf32>
    %9 = vector.multi_reduction <add>, %8, %cst_6 [0] : vector<64x32xf32> to vector<32xf32>
    %10 = vector.shape_cast %9 : vector<32xf32> to vector<1x32xf32>
    %cst_7 = arith.constant 6.400000e+01 : f32
    %11 = vector.broadcast %cst_7 : f32 to vector<1x32xf32>
    %12 = arith.divf %10, %11 : vector<1x32xf32>
    %13 = vector.extract_strided_slice %7 {offsets = [64, 0], sizes = [64, 32], strides = [1, 1]} : vector<128x32xf32> to vector<64x32xf32>
    %cst_8 = arith.constant dense<0.000000e+00> : vector<32xf32>
    %14 = vector.multi_reduction <add>, %13, %cst_8 [0] : vector<64x32xf32> to vector<32xf32>
    %15 = vector.shape_cast %14 : vector<32xf32> to vector<1x32xf32>
    %cst_9 = arith.constant 6.400000e+01 : f32
    %16 = vector.broadcast %cst_9 : f32 to vector<1x32xf32>
    %17 = arith.divf %15, %16 : vector<1x32xf32>
    %18 = tpu.concatenate %12, %17 in 0 : vector<1x32xf32>, vector<1x32xf32> -> vector<2x32xf32>
    %19 = arith.truncf %18 : vector<2x32xf32> to vector<2x32xbf16>
    %c0_10 = arith.constant 0 : index
    %c0_11 = arith.constant 0 : index
    %20 = vector.load %arg5[%c0_10, %c0_11] : memref<32x8xbf16, #tpu.memory_space<vmem>>, vector<32x8xbf16>
    %cst_12 = arith.constant dense<0.000000e+00> : vector<2x8xf32>
    %21 = tpu.matmul %19, %20, %cst_12 {dimension_numbers = #tpu.dot_dimension_numbers<[1], [0], [0], [1], [0, 0, 1, 1], [], []>} : vector<2x32xbf16>, vector<32x8xbf16>, vector<2x8xf32> -> vector<2x8xf32>
    %c0_13 = arith.constant 0 : index
    %c0_14 = arith.constant 0 : index
    %22 = vector.load %arg6[%c0_13, %c0_14] : memref<1x8xf32, #tpu.memory_space<vmem>>, vector<1x8xf32>
    %23 = vector.broadcast %22 : vector<1x8xf32> to vector<2x8xf32>
    %24 = arith.addf %21, %23 : vector<2x8xf32>
    %cst_15 = arith.constant 0.000000e+00 : f32
    %25 = vector.broadcast %cst_15 : f32 to vector<2x8xf32>
    %26 = arith.maximumf %24, %25 : vector<2x8xf32>
    %27 = arith.truncf %26 : vector<2x8xf32> to vector<2x8xbf16>
    %c0_16 = arith.constant 0 : index
    %c0_17 = arith.constant 0 : index
    %28 = vector.load %arg7[%c0_16, %c0_17] : memref<8x32xbf16, #tpu.memory_space<vmem>>, vector<8x32xbf16>
    %cst_18 = arith.constant dense<0.000000e+00> : vector<2x32xf32>
    %29 = tpu.matmul %27, %28, %cst_18 {dimension_numbers = #tpu.dot_dimension_numbers<[1], [0], [0], [1], [0, 0, 1, 1], [], []>} : vector<2x8xbf16>, vector<8x32xbf16>, vector<2x32xf32> -> vector<2x32xf32>
    %c0_19 = arith.constant 0 : index
    %c0_20 = arith.constant 0 : index
    %30 = vector.load %arg8[%c0_19, %c0_20] : memref<1x32xf32, #tpu.memory_space<vmem>>, vector<1x32xf32>
    %31 = vector.broadcast %30 : vector<1x32xf32> to vector<2x32xf32>
    %32 = arith.addf %29, %31 : vector<2x32xf32>
    %33 = arith.negf %32 : vector<2x32xf32>
    %34 = math.exp %33 : vector<2x32xf32>
    %cst_21 = arith.constant 1.000000e+00 : f32
    %35 = vector.broadcast %cst_21 : f32 to vector<2x32xf32>
    %36 = arith.addf %35, %34 : vector<2x32xf32>
    %37 = arith.divf %35, %36 : vector<2x32xf32>
    %38 = vector.extract_strided_slice %7 {offsets = [0, 0], sizes = [64, 32], strides = [1, 1]} : vector<128x32xf32> to vector<64x32xf32>
    %39 = vector.extract_strided_slice %37 {offsets = [0, 0], sizes = [1, 32], strides = [1, 1]} : vector<2x32xf32> to vector<1x32xf32>
    %40 = vector.broadcast %39 : vector<1x32xf32> to vector<64x32xf32>
    %41 = arith.mulf %38, %40 : vector<64x32xf32>
    %42 = vector.extract_strided_slice %7 {offsets = [64, 0], sizes = [64, 32], strides = [1, 1]} : vector<128x32xf32> to vector<64x32xf32>
    %43 = vector.extract_strided_slice %37 {offsets = [1, 0], sizes = [1, 32], strides = [1, 1]} : vector<2x32xf32> to vector<1x32xf32>
    %44 = vector.broadcast %43 : vector<1x32xf32> to vector<64x32xf32>
    %45 = arith.mulf %42, %44 : vector<64x32xf32>
    %46 = tpu.concatenate %41, %45 in 0 : vector<64x32xf32>, vector<64x32xf32> -> vector<128x32xf32>
    %47 = arith.truncf %46 : vector<128x32xf32> to vector<128x32xbf16>
    %c0_22 = arith.constant 0 : index
    %c0_23 = arith.constant 0 : index
    %48 = vector.load %arg9[%c0_22, %c0_23] : memref<32x32xbf16, #tpu.memory_space<vmem>>, vector<32x32xbf16>
    %cst_24 = arith.constant dense<0.000000e+00> : vector<128x32xf32>
    %49 = tpu.matmul %47, %48, %cst_24 {dimension_numbers = #tpu.dot_dimension_numbers<[1], [0], [0], [1], [0, 0, 1, 1], [], []>} : vector<128x32xbf16>, vector<32x32xbf16>, vector<128x32xf32> -> vector<128x32xf32>
    %c0_25 = arith.constant 0 : index
    %c0_26 = arith.constant 0 : index
    %50 = vector.load %arg10[%c0_25, %c0_26] : memref<1x32xf32, #tpu.memory_space<vmem>>, vector<1x32xf32>
    %51 = vector.broadcast %50 : vector<1x32xf32> to vector<128x32xf32>
    %52 = arith.addf %49, %51 : vector<128x32xf32>
    %c0_27 = arith.constant 0 : index
    %c0_28 = arith.constant 0 : index
    %53 = vector.load %arg2[%c0_27, %c0_28] : memref<128x32xbf16, #tpu.memory_space<vmem>>, vector<128x32xbf16>
    %54 = arith.extf %53 : vector<128x32xbf16> to vector<128x32xf32>
    %55 = arith.addf %52, %54 : vector<128x32xf32>
    %cst_29 = arith.constant 0.000000e+00 : f32
    %56 = vector.broadcast %cst_29 : f32 to vector<128x32xf32>
    %57 = arith.maximumf %55, %56 : vector<128x32xf32>
    %58 = vector.extract_strided_slice %57 {offsets = [0, 0], sizes = [64, 32], strides = [1, 1]} : vector<128x32xf32> to vector<64x32xf32>
    %cst_30 = arith.constant dense<0.000000e+00> : vector<32xf32>
    %59 = vector.multi_reduction <add>, %58, %cst_30 [0] : vector<64x32xf32> to vector<32xf32>
    %60 = vector.shape_cast %59 : vector<32xf32> to vector<1x32xf32>
    %cst_31 = arith.constant 6.400000e+01 : f32
    %61 = vector.broadcast %cst_31 : f32 to vector<1x32xf32>
    %62 = arith.divf %60, %61 : vector<1x32xf32>
    %63 = vector.extract_strided_slice %57 {offsets = [64, 0], sizes = [64, 32], strides = [1, 1]} : vector<128x32xf32> to vector<64x32xf32>
    %cst_32 = arith.constant dense<0.000000e+00> : vector<32xf32>
    %64 = vector.multi_reduction <add>, %63, %cst_32 [0] : vector<64x32xf32> to vector<32xf32>
    %65 = vector.shape_cast %64 : vector<32xf32> to vector<1x32xf32>
    %cst_33 = arith.constant 6.400000e+01 : f32
    %66 = vector.broadcast %cst_33 : f32 to vector<1x32xf32>
    %67 = arith.divf %65, %66 : vector<1x32xf32>
    %68 = tpu.concatenate %62, %67 in 0 : vector<1x32xf32>, vector<1x32xf32> -> vector<2x32xf32>
    %69 = arith.truncf %68 : vector<2x32xf32> to vector<2x32xbf16>
    %c0_34 = arith.constant 0 : index
    %c0_35 = arith.constant 0 : index
    %70 = vector.load %arg11[%c0_34, %c0_35] : memref<32x10xbf16, #tpu.memory_space<vmem>>, vector<32x10xbf16>
    %cst_36 = arith.constant dense<0.000000e+00> : vector<2x10xf32>
    %71 = tpu.matmul %69, %70, %cst_36 {dimension_numbers = #tpu.dot_dimension_numbers<[1], [0], [0], [1], [0, 0, 1, 1], [], []>} : vector<2x32xbf16>, vector<32x10xbf16>, vector<2x10xf32> -> vector<2x10xf32>
    %c0_37 = arith.constant 0 : index
    %c0_38 = arith.constant 0 : index
    %72 = vector.load %arg12[%c0_37, %c0_38] : memref<1x10xf32, #tpu.memory_space<vmem>>, vector<1x10xf32>
    %73 = vector.broadcast %72 : vector<1x10xf32> to vector<2x10xf32>
    %74 = arith.addf %71, %73 : vector<2x10xf32>
    %c0_39 = arith.constant 0 : index
    %c0_40 = arith.constant 0 : index
    %75 = vector.load %arg13[%c0_39, %c0_40] : memref<2x10xf32, #tpu.memory_space<vmem>>, vector<2x10xf32>
    tpu.vector_store %arg13[%c0_39, %c0_40], %74 {strides = array<i32>} : memref<2x10xf32, #tpu.memory_space<vmem>>, vector<2x10xf32>,
    return
  }
  func.func @transform_0(%arg0: i32) -> (i32, i32) {
    %c0_i32 = arith.constant 0 : i32
    %c0_i32_0 = arith.constant 0 : i32
    %c0_i32_1 = arith.constant 0 : i32
    return %c0_i32, %c0_i32_0 : i32, i32
  }
  func.func @transform_1(%arg0: i32) -> (i32, i32) {
    %c0_i32 = arith.constant 0 : i32
    %c0_i32_0 = arith.constant 0 : i32
    %c0_i32_1 = arith.constant 0 : i32
    return %c0_i32, %c0_i32_0 : i32, i32
  }
  func.func @transform_2(%arg0: i32) -> (i32, i32) {
    %c0_i32 = arith.constant 0 : i32
    %c0_i32_0 = arith.constant 0 : i32
    %c0_i32_1 = arith.constant 0 : i32
    return %c0_i32, %c0_i32_0 : i32, i32
  }
  func.func @transform_3(%arg0: i32) -> (i32, i32) {
    %c0_i32 = arith.constant 0 : i32
    %c0_i32_0 = arith.constant 0 : i32
    %c0_i32_1 = arith.constant 0 : i32
    return %c0_i32, %c0_i32_0 : i32, i32
  }
  func.func @transform_4(%arg0: i32) -> (i32, i32) {
    %c0_i32 = arith.constant 0 : i32
    %c0_i32_0 = arith.constant 0 : i32
    %c0_i32_1 = arith.constant 0 : i32
    return %c0_i32, %c0_i32_0 : i32, i32
  }
  func.func @transform_5(%arg0: i32) -> (i32, i32) {
    %c0_i32 = arith.constant 0 : i32
    %c0_i32_0 = arith.constant 0 : i32
    %c0_i32_1 = arith.constant 0 : i32
    return %c0_i32, %c0_i32_0 : i32, i32
  }
  func.func @transform_6(%arg0: i32) -> (i32, i32) {
    %c0_i32 = arith.constant 0 : i32
    %c0_i32_0 = arith.constant 0 : i32
    %c0_i32_1 = arith.constant 0 : i32
    return %c0_i32, %c0_i32_0 : i32, i32
  }
  func.func @transform_7(%arg0: i32) -> (i32, i32) {
    %c0_i32 = arith.constant 0 : i32
    %c0_i32_0 = arith.constant 0 : i32
    %c0_i32_1 = arith.constant 0 : i32
    return %c0_i32, %c0_i32_0 : i32, i32
  }
  func.func @transform_8(%arg0: i32) -> (i32, i32) {
    %c0_i32 = arith.constant 0 : i32
    %c0_i32_0 = arith.constant 0 : i32
    %c0_i32_1 = arith.constant 0 : i32
    return %c0_i32, %c0_i32_0 : i32, i32
  }
  func.func @transform_9(%arg0: i32) -> (i32, i32) {
    %c0_i32 = arith.constant 0 : i32
    %c0_i32_0 = arith.constant 0 : i32
    %c0_i32_1 = arith.constant 0 : i32
    return %c0_i32, %c0_i32_0 : i32, i32
  }
  func.func @transform_10(%arg0: i32) -> (i32, i32) {
    %c0_i32 = arith.constant 0 : i32
    %c0_i32_0 = arith.constant 0 : i32
    %c0_i32_1 = arith.constant 0 : i32
    return %c0_i32, %c0_i32_0 : i32, i32
  }
  func.func @transform_11(%arg0: i32) -> (i32, i32) {
    %c0_i32 = arith.constant 0 : i32
    %c0_i32_0 = arith.constant 0 : i32
    %c0_i32_1 = arith.constant 0 : i32
    return %c0_i32, %c0_i32_0 : i32, i32
  }
  func.func @transform_12(%arg0: i32) -> (i32, i32) {
    %c0_i32 = arith.constant 0 : i32
    %c0_i32_0 = arith.constant 0 : i32
    %c0_i32_1 = arith.constant 0 : i32
    return %c0_i32, %c0_i32_0 : i32, i32
  }
}

</mosaic_0001>

<llo_original>
// kernel: _lambda_.2
$region0: #{_lambda_.2}
  #allocation0 [shape = 'u32[]', space=smem, size = 0x4, offset = 0x4, fixed_abs, tag = 'smem constant byte address 0x4 - core index']
  #allocation1 [shape = 'u32[144,128]{1,0:T(1,128)}', space=vmem, size = 0x12000, scoped, tag = 'internal scratch']
  %s0 = inlined_call_operand.vmem [shape: bf16[512,27], index: 0, kind: input, shape index: {}]
  %s1 = inlined_call_operand.vmem [shape: bf16[27,16], index: 1, kind: input, shape index: {}]
  %s2 = inlined_call_operand.vmem [shape: f32[1,16], index: 2, kind: input, shape index: {}]
  %s3 = inlined_call_operand.vmem [shape: bf16[16,64], index: 3, kind: input, shape index: {}]
  %s4 = inlined_call_operand.vmem [shape: f32[1,64], index: 4, kind: input, shape index: {}]
  %s5 = inlined_call_operand.vmem [shape: bf16[512,64], index: 5, kind: output, shape index: {}]
  %s6 = sld [smem:[#allocation0]]
  $region30: #{_lambda_.2} parent=0
    _
  %s8 = ssub.s32 1, %s6
  %s9 = scalar_select 0, %s8, %s6
  // Predicated region
  $region2: #{_lambda_.2} parent=0 // pred_check
    _
  $region3: #{_lambda_.2} parent=0 // pred_check_branch
    %11 = sbr.rel (0) target = $region5
  $region4: #{_lambda_.2} parent=0 // pred_region
    _
  $region5: #{_lambda_.2} parent=0 // pred_fallthru
    _
  // Predicated region
  $region6: #{_lambda_.2} parent=0 // pred_check
    _
  $region7: #{_lambda_.2} parent=0 // pred_check_branch
    %13 = sbr.rel (0) target = $region9
  $region8: #{_lambda_.2} parent=0 // pred_region
    _
  $region9: #{_lambda_.2} parent=0 // pred_fallthru
    _
  // Predicated region
  $region10: #{_lambda_.2} parent=0 // pred_check
    _
  $region11: #{_lambda_.2} parent=0 // pred_check_branch
    %15 = sbr.rel (0) target = $region13
  $region12: #{_lambda_.2} parent=0 // pred_region
    _
  $region13: #{_lambda_.2} parent=0 // pred_fallthru
    _
  // Predicated region
  $region14: #{_lambda_.2} parent=0 // pred_check
    _
  $region15: #{_lambda_.2} parent=0 // pred_check_branch
    %17 = sbr.rel (0) target = $region17
  $region16: #{_lambda_.2} parent=0 // pred_region
    _
  $region17: #{_lambda_.2} parent=0 // pred_fallthru
    _
  // Predicated region
  $region18: #{_lambda_.2} parent=0 // pred_check
    _
  $region19: #{_lambda_.2} parent=0 // pred_check_branch
    %19 = sbr.rel (0) target = $region21
  $region20: #{_lambda_.2} parent=0 // pred_region
    _
  $region21: #{_lambda_.2} parent=0 // pred_fallthru
    _
  %v21 = vld [vmem:[%s0] sm:$0xf]
  %v22 = vld [vmem:[%s0 + $0x4] sm:$0xf]
  %v23 = vld [vmem:[%s0 + $0x8] sm:$0xf]
  %v24 = vld [vmem:[%s0 + $0xc] sm:$0xf]
  %v25 = vld [vmem:[%s0 + $0x10] sm:$0xf]
  %v26 = vld [vmem:[%s0 + $0x14] sm:$0xf]
  %v27 = vld [vmem:[%s0 + $0x18] sm:$0xf]
  %v28 = vld [vmem:[%s0 + $0x1c] sm:$0xf]
  %v29 = vld [vmem:[%s0 + $0x20] sm:$0xf]
  %v30 = vld [vmem:[%s0 + $0x24] sm:$0xf]
  %v31 = vld [vmem:[%s0 + $0x28] sm:$0xf]
  %v32 = vld [vmem:[%s0 + $0x2c] sm:$0xf]
  %v33 = vld [vmem:[%s0 + $0x30] sm:$0xf]
  %v34 = vld [vmem:[%s0 + $0x34] sm:$0xf]
  %v35 = vld [vmem:[%s0 + $0x38] sm:$0xf]
  %v36 = vld [vmem:[%s0 + $0x3c] sm:$0xf]
  %v37 = vld [vmem:[%s0 + $0x40] sm:$0xf]
  %v38 = vld [vmem:[%s0 + $0x44] sm:$0xf]
  %v39 = vld [vmem:[%s0 + $0x48] sm:$0xf]
  %v40 = vld [vmem:[%s0 + $0x4c] sm:$0xf]
  %v41 = vld [vmem:[%s0 + $0x50] sm:$0xf]
  %v42 = vld [vmem:[%s0 + $0x54] sm:$0xf]
  %v43 = vld [vmem:[%s0 + $0x58] sm:$0xf]
  %v44 = vld [vmem:[%s0 + $0x5c] sm:$0xf]
  %v45 = vld [vmem:[%s0 + $0x60] sm:$0xf]
  %v46 = vld [vmem:[%s0 + $0x64] sm:$0xf]
  %v47 = vld [vmem:[%s0 + $0x68] sm:$0xf]
  %v48 = vld [vmem:[%s0 + $0x6c] sm:$0xf]
  %v49 = vld [vmem:[%s0 + $0x70] sm:$0xf]
  %v50 = vld [vmem:[%s0 + $0x74] sm:$0xf]
  %v51 = vld [vmem:[%s0 + $0x78] sm:$0xf]
  %v52 = vld [vmem:[%s0 + $0x7c] sm:$0xf]
  %v53 = vld [vmem:[%s0 + $0x80] sm:$0xf]
  %v54 = vld [vmem:[%s0 + $0x84] sm:$0xf]
  %v55 = vld [vmem:[%s0 + $0x88] sm:$0xf]
  %v56 = vld [vmem:[%s0 + $0x8c] sm:$0xf]
  %v57 = vld [vmem:[%s0 + $0x90] sm:$0xf]
  %v58 = vld [vmem:[%s0 + $0x94] sm:$0xf]
  %v59 = vld [vmem:[%s0 + $0x98] sm:$0xf]
  %v60 = vld [vmem:[%s0 + $0x9c] sm:$0xf]
  %v61 = vld [vmem:[%s0 + $0xa0] sm:$0xf]
  %v62 = vld [vmem:[%s0 + $0xa4] sm:$0xf]
  %v63 = vld [vmem:[%s0 + $0xa8] sm:$0xf]
  %v64 = vld [vmem:[%s0 + $0xac] sm:$0xf]
  %v65 = vld [vmem:[%s0 + $0xb0] sm:$0xf]
  %v66 = vld [vmem:[%s0 + $0xb4] sm:$0xf]
  %v67 = vld [vmem:[%s0 + $0xb8] sm:$0xf]
  %v68 = vld [vmem:[%s0 + $0xbc] sm:$0xf]
  %v69 = vld [vmem:[%s0 + $0xc0] sm:$0xf]
  %v70 = vld [vmem:[%s0 + $0xc4] sm:$0xf]
  %v71 = vld [vmem:[%s0 + $0xc8] sm:$0xf]
  %v72 = vld [vmem:[%s0 + $0xcc] sm:$0xf]
  %v73 = vld [vmem:[%s0 + $0xd0] sm:$0xf]
  %v74 = vld [vmem:[%s0 + $0xd4] sm:$0xf]
  %v75 = vld [vmem:[%s0 + $0xd8] sm:$0xf]
  %v76 = vld [vmem:[%s0 + $0xdc] sm:$0xf]
  %v77 = vld [vmem:[%s0 + $0xe0] sm:$0xf]
  %v78 = vld [vmem:[%s0 + $0xe4] sm:$0xf]
  %v79 = vld [vmem:[%s0 + $0xe8] sm:$0xf]
  %v80 = vld [vmem:[%s0 + $0xec] sm:$0xf]
  %v81 = vld [vmem:[%s0 + $0xf0] sm:$0xf]
  %v82 = vld [vmem:[%s0 + $0xf4] sm:$0xf]
  %v83 = vld [vmem:[%s0 + $0xf8] sm:$0xf]
  %v84 = vld [vmem:[%s0 + $0xfc] sm:$0xf]
  %v85 = vld [vmem:[%s1] sm:$0xf]
  %v86 = vld [vmem:[%s1 + $0x4] sm:$0xf]
  %v87 = vld [vmem:[%s1 + $0x8] sm:$0xf]
  %v88 = vld [vmem:[%s1 + $0xc] sm:$0x3]
  %v89 = vld [vmem:[%s2] sm:$0x1]
  %v91 = vlaneseq
  %v92 = vshrl.u32 %v91, 7
  %v93 = vsub.s32 0, %v92
  %v94 = vrot.slane %v89, %v93
  %v160 = vunpack.c.l.b16 %v21
  %v161 = vunpack.c.l.b16 %v22
  %v162 = vunpack.c.l.b16 %v23
  %v163 = vunpack.c.l.b16 %v24
  %v164 = vunpack.c.l.b16 %v25
  %v165 = vunpack.c.l.b16 %v26
  %v166 = vunpack.c.l.b16 %v27
  %v167 = vunpack.c.l.b16 %v28
  %v168 = vunpack.c.l.b16 %v29
  %v169 = vunpack.c.l.b16 %v30
  %v170 = vunpack.c.l.b16 %v31
  %v171 = vunpack.c.l.b16 %v32
  %v172 = vunpack.c.l.b16 %v33
  %v173 = vunpack.c.l.b16 %v34
  %v174 = vunpack.c.l.b16 %v35
  %v175 = vunpack.c.l.b16 %v36
  %v176 = vunpack.c.l.b16 %v37
  %v177 = vunpack.c.l.b16 %v38
  %v178 = vunpack.c.l.b16 %v39
  %v179 = vunpack.c.l.b16 %v40
  %v180 = vunpack.c.l.b16 %v41
  %v181 = vunpack.c.l.b16 %v42
  %v182 = vunpack.c.l.b16 %v43
  %v183 = vunpack.c.l.b16 %v44
  %v184 = vunpack.c.l.b16 %v45
  %v185 = vunpack.c.l.b16 %v46
  %v186 = vunpack.c.l.b16 %v47
  %v187 = vunpack.c.l.b16 %v48
  %v188 = vunpack.c.l.b16 %v49
  %v189 = vunpack.c.l.b16 %v50
  %v190 = vunpack.c.l.b16 %v51
  %v191 = vunpack.c.l.b16 %v52
  %v192 = vunpack.c.l.b16 %v53
  %v193 = vunpack.c.l.b16 %v54
  %v194 = vunpack.c.l.b16 %v55
  %v195 = vunpack.c.l.b16 %v56
  %v196 = vunpack.c.l.b16 %v57
  %v197 = vunpack.c.l.b16 %v58
  %v198 = vunpack.c.l.b16 %v59
  %v199 = vunpack.c.l.b16 %v60
  %v200 = vunpack.c.l.b16 %v61
  %v201 = vunpack.c.l.b16 %v62
  %v202 = vunpack.c.l.b16 %v63
  %v203 = vunpack.c.l.b16 %v64
  %v204 = vunpack.c.l.b16 %v65
  %v205 = vunpack.c.l.b16 %v66
  %v206 = vunpack.c.l.b16 %v67
  %v207 = vunpack.c.l.b16 %v68
  %v208 = vunpack.c.l.b16 %v69
  %v209 = vunpack.c.l.b16 %v70
  %v210 = vunpack.c.l.b16 %v71
  %v211 = vunpack.c.l.b16 %v72
  %v212 = vunpack.c.l.b16 %v73
  %v213 = vunpack.c.l.b16 %v74
  %v214 = vunpack.c.l.b16 %v75
  %v215 = vunpack.c.l.b16 %v76
  %v216 = vunpack.c.l.b16 %v77
  %v217 = vunpack.c.l.b16 %v78
  %v218 = vunpack.c.l.b16 %v79
  %v219 = vunpack.c.l.b16 %v80
  %v220 = vunpack.c.l.b16 %v81
  %v221 = vunpack.c.l.b16 %v82
  %v222 = vunpack.c.l.b16 %v83
  %v223 = vunpack.c.l.b16 %v84
  %v224 = vpack.c.b16 %v161, %v160
  %v225 = vpack.c.b16 %v163, %v162
  %v226 = vpack.c.b16 %v165, %v164
  %v227 = vpack.c.b16 %v167, %v166
  %v228 = vpack.c.b16 %v169, %v168
  %v229 = vpack.c.b16 %v171, %v170
  %v230 = vpack.c.b16 %v173, %v172
  %v231 = vpack.c.b16 %v175, %v174
  %v232 = vpack.c.b16 %v177, %v176
  %v233 = vpack.c.b16 %v179, %v178
  %v234 = vpack.c.b16 %v181, %v180
  %v235 = vpack.c.b16 %v183, %v182
  %v236 = vpack.c.b16 %v185, %v184
  %v237 = vpack.c.b16 %v187, %v186
  %v238 = vpack.c.b16 %v189, %v188
  %v239 = vpack.c.b16 %v191, %v190
  %v240 = vpack.c.b16 %v193, %v192
  %v241 = vpack.c.b16 %v195, %v194
  %v242 = vpack.c.b16 %v197, %v196
  %v243 = vpack.c.b16 %v199, %v198
  %v244 = vpack.c.b16 %v201, %v200
  %v245 = vpack.c.b16 %v203, %v202
  %v246 = vpack.c.b16 %v205, %v204
  %v247 = vpack.c.b16 %v207, %v206
  %v248 = vpack.c.b16 %v209, %v208
  %v249 = vpack.c.b16 %v211, %v210
  %v250 = vpack.c.b16 %v213, %v212
  %v251 = vpack.c.b16 %v215, %v214
  %v252 = vpack.c.b16 %v217, %v216
  %v253 = vpack.c.b16 %v219, %v218
  %v254 = vpack.c.b16 %v221, %v220
  %v255 = vpack.c.b16 %v223, %v222
  %v260 = vunpack.c.l.b16 %v85
  %v261 = vunpack.c.l.b16 %v86
  %v262 = vunpack.c.l.b16 %v87
  %v263 = vunpack.c.l.b16 %v88
  %v264 = vpack.c.b16 %v261, %v260
  %v265 = vpack.c.b16 %v263, %v262
  %vm267 = vcmask 220160
  %v269 = vsel %vm267, %v224, 0
  %v272 = vsel %vm267, %v225, 0
  %v275 = vsel %vm267, %v226, 0
  %v278 = vsel %vm267, %v227, 0
  %v281 = vsel %vm267, %v228, 0
  %v284 = vsel %vm267, %v229, 0
  %v287 = vsel %vm267, %v230, 0
  %v290 = vsel %vm267, %v231, 0
  %v293 = vsel %vm267, %v232, 0
  %v296 = vsel %vm267, %v233, 0
  %v299 = vsel %vm267, %v234, 0
  %v302 = vsel %vm267, %v235, 0
  %v305 = vsel %vm267, %v236, 0
  %v308 = vsel %vm267, %v237, 0
  %v311 = vsel %vm267, %v238, 0
  %v314 = vsel %vm267, %v239, 0
  %v317 = vsel %vm267, %v240, 0
  %v320 = vsel %vm267, %v241, 0
  %v323 = vsel %vm267, %v242, 0
  %v326 = vsel %vm267, %v243, 0
  %v329 = vsel %vm267, %v244, 0
  %v332 = vsel %vm267, %v245, 0
  %v335 = vsel %vm267, %v246, 0
  %v338 = vsel %vm267, %v247, 0
  %v341 = vsel %vm267, %v248, 0
  %v344 = vsel %vm267, %v249, 0
  %v347 = vsel %vm267, %v250, 0
  %v350 = vsel %vm267, %v251, 0
  %v353 = vsel %vm267, %v252, 0
  %v356 = vsel %vm267, %v253, 0
  %v359 = vsel %vm267, %v254, 0
  %v362 = vsel %vm267, %v255, 0
  %vm364 = vcmask 1044480
  %vm365 = vcmask 1045504
  %v366 = vsel %vm364, 4294967295, 65535
  %v367 = vsel %vm365, %v366, 0
  %v369 = vand.u32 %v265, %v367
  %371 = vmatprep.subr.bf16.mxu0 0
  %372 = vmatpush1.bf16.msra.mxu0 %v264
  %373 = vmatprep.subr.bf16.mxu0 0
  %374 = vmatpush1.bf16.msra.mxu0 %v369
  %375 = vmatprep.subr.bf16.mxu0 0
  %376 = vmatpush1.bf16.msra.mxu0 0
  %377 = vmatprep.subr.bf16.mxu0 0
  %378 = vmatpush1.bf16.msra.mxu0 0
  %379 = vmatprep.subr.bf16.mxu0 0
  %380 = vmatpush1.bf16.msra.mxu0 0
  %381 = vmatprep.subr.bf16.mxu0 0
  %382 = vmatpush1.bf16.msra.mxu0 0
  %383 = vmatprep.subr.bf16.mxu0 0
  %384 = vmatpush1.bf16.msra.mxu0 0
  %385 = vmatprep.subr.bf16.mxu0 0
  %386 = vmatpush1.bf16.msra.mxu0 0
  %387 = vmatprep.subr.bf16.mxu0 0
  %388 = vmatpush1.bf16.msra.mxu0 0
  %389 = vmatprep.subr.bf16.mxu0 0
  %390 = vmatpush1.bf16.msra.mxu0 0
  %391 = vmatprep.subr.bf16.mxu0 0
  %392 = vmatpush1.bf16.msra.mxu0 0
  %393 = vmatprep.subr.bf16.mxu0 0
  %394 = vmatpush1.bf16.msra.mxu0 0
  %395 = vmatprep.subr.bf16.mxu0 0
  %396 = vmatpush1.bf16.msra.mxu0 0
  %397 = vmatprep.subr.bf16.mxu0 0
  %398 = vmatpush1.bf16.msra.mxu0 0
  %399 = vmatprep.subr.bf16.mxu0 0
  %400 = vmatpush1.bf16.msra.mxu0 0
  %401 = vmatprep.subr.bf16.mxu0 0
  %402 = vmatpush1.bf16.msra.mxu0 0
  %403 = vmatprep.mubr.bf16.mxu0 0
  %404 = vmatmul.mubr.bf16.gmra.mrb[0].mxu0 %v269
  %v405 = vpop.f32.mrb[0].mxu0
  %v406 = vadd.f32 %v94, %v405
  %v407 = vpop.f32.mrb[0].mxu0
  %v408 = vpop.f32.mrb[0].mxu0
  %v409 = vadd.f32 %v94, %v408
  %v410 = vpop.f32.mrb[0].mxu0
  %411 = vmatprep.mubr.bf16.mxu0 0
  %412 = vmatmul.mubr.bf16.gmra.mrb[0].mxu0 %v272
  %v413 = vpop.f32.mrb[0].mxu0
  %v414 = vadd.f32 %v94, %v413
  %v415 = vpop.f32.mrb[0].mxu0
  %v416 = vpop.f32.mrb[0].mxu0
  %v417 = vadd.f32 %v94, %v416
  %v418 = vpop.f32.mrb[0].mxu0
  %419 = vmatprep.mubr.bf16.mxu0 0
  %420 = vmatmul.mubr.bf16.gmra.mrb[0].mxu0 %v275
  %v421 = vpop.f32.mrb[0].mxu0
  %v422 = vadd.f32 %v94, %v421
  %v423 = vpop.f32.mrb[0].mxu0
  %v424 = vpop.f32.mrb[0].mxu0
  %v425 = vadd.f32 %v94, %v424
  %v426 = vpop.f32.mrb[0].mxu0
  %427 = vmatprep.mubr.bf16.mxu0 0
  %428 = vmatmul.mubr.bf16.gmra.mrb[0].mxu0 %v278
  %v429 = vpop.f32.mrb[0].mxu0
  %v430 = vadd.f32 %v94, %v429
  %v431 = vpop.f32.mrb[0].mxu0
  %v432 = vpop.f32.mrb[0].mxu0
  %v433 = vadd.f32 %v94, %v432
  %v434 = vpop.f32.mrb[0].mxu0
  %435 = vmatprep.mubr.bf16.mxu0 0
  %436 = vmatmul.mubr.bf16.gmra.mrb[0].mxu0 %v281
  %v437 = vpop.f32.mrb[0].mxu0
  %v438 = vadd.f32 %v94, %v437
  %v439 = vpop.f32.mrb[0].mxu0
  %v440 = vpop.f32.mrb[0].mxu0
  %v441 = vadd.f32 %v94, %v440
  %v442 = vpop.f32.mrb[0].mxu0
  %443 = vmatprep.mubr.bf16.mxu0 0
  %444 = vmatmul.mubr.bf16.gmra.mrb[0].mxu0 %v284
  %v445 = vpop.f32.mrb[0].mxu0
  %v446 = vadd.f32 %v94, %v445
  %v447 = vpop.f32.mrb[0].mxu0
  %v448 = vpop.f32.mrb[0].mxu0
  %v449 = vadd.f32 %v94, %v448
  %v450 = vpop.f32.mrb[0].mxu0
  %451 = vmatprep.mubr.bf16.mxu0 0
  %452 = vmatmul.mubr.bf16.gmra.mrb[0].mxu0 %v287
  %v453 = vpop.f32.mrb[0].mxu0
  %v454 = vadd.f32 %v94, %v453
  %v455 = vpop.f32.mrb[0].mxu0
  %v456 = vpop.f32.mrb[0].mxu0
  %v457 = vadd.f32 %v94, %v456
  %v458 = vpop.f32.mrb[0].mxu0
  %459 = vmatprep.mubr.bf16.mxu0 0
  %460 = vmatmul.mubr.bf16.gmra.mrb[0].mxu0 %v290
  %v461 = vpop.f32.mrb[0].mxu0
  %v462 = vadd.f32 %v94, %v461
  %v463 = vpop.f32.mrb[0].mxu0
  %v464 = vpop.f32.mrb[0].mxu0
  %v465 = vadd.f32 %v94, %v464
  %v466 = vpop.f32.mrb[0].mxu0
  %467 = vmatprep.mubr.bf16.mxu0 0
  %468 = vmatmul.mubr.bf16.gmra.mrb[0].mxu0 %v293
  %v469 = vpop.f32.mrb[0].mxu0
  %v470 = vadd.f32 %v94, %v469
  %v471 = vpop.f32.mrb[0].mxu0
  %v472 = vpop.f32.mrb[0].mxu0
  %v473 = vadd.f32 %v94, %v472
  %v474 = vpop.f32.mrb[0].mxu0
  %475 = vmatprep.mubr.bf16.mxu0 0
  %476 = vmatmul.mubr.bf16.gmra.mrb[0].mxu0 %v296
  %v477 = vpop.f32.mrb[0].mxu0
  %v478 = vadd.f32 %v94, %v477
  %v479 = vpop.f32.mrb[0].mxu0
  %v480 = vpop.f32.mrb[0].mxu0
  %v481 = vadd.f32 %v94, %v480
  %v482 = vpop.f32.mrb[0].mxu0
  %483 = vmatprep.mubr.bf16.mxu0 0
  %484 = vmatmul.mubr.bf16.gmra.mrb[0].mxu0 %v299
  %v485 = vpop.f32.mrb[0].mxu0
  %v486 = vadd.f32 %v94, %v485
  %v487 = vpop.f32.mrb[0].mxu0
  %v488 = vpop.f32.mrb[0].mxu0
  %v489 = vadd.f32 %v94, %v488
  %v490 = vpop.f32.mrb[0].mxu0
  %491 = vmatprep.mubr.bf16.mxu0 0
  %492 = vmatmul.mubr.bf16.gmra.mrb[0].mxu0 %v302
  %v493 = vpop.f32.mrb[0].mxu0
  %v494 = vadd.f32 %v94, %v493
  %v495 = vpop.f32.mrb[0].mxu0
  %v496 = vpop.f32.mrb[0].mxu0
  %v497 = vadd.f32 %v94, %v496
  %v498 = vpop.f32.mrb[0].mxu0
  %499 = vmatprep.mubr.bf16.mxu0 0
  %500 = vmatmul.mubr.bf16.gmra.mrb[0].mxu0 %v305
  %v501 = vpop.f32.mrb[0].mxu0
  %v502 = vadd.f32 %v94, %v501
  %v503 = vpop.f32.mrb[0].mxu0
  %v504 = vpop.f32.mrb[0].mxu0
  %v505 = vadd.f32 %v94, %v504
  %v506 = vpop.f32.mrb[0].mxu0
  %507 = vmatprep.mubr.bf16.mxu0 0
  %508 = vmatmul.mubr.bf16.gmra.mrb[0].mxu0 %v308
  %v509 = vpop.f32.mrb[0].mxu0
  %v510 = vadd.f32 %v94, %v509
  %v511 = vpop.f32.mrb[0].mxu0
  %v512 = vpop.f32.mrb[0].mxu0
  %v513 = vadd.f32 %v94, %v512
  %v514 = vpop.f32.mrb[0].mxu0
  %515 = vmatprep.mubr.bf16.mxu0 0
  %516 = vmatmul.mubr.bf16.gmra.mrb[0].mxu0 %v311
  %v517 = vpop.f32.mrb[0].mxu0
  %v518 = vadd.f32 %v94, %v517
  %v519 = vpop.f32.mrb[0].mxu0
  %v520 = vpop.f32.mrb[0].mxu0
  %v521 = vadd.f32 %v94, %v520
  %v522 = vpop.f32.mrb[0].mxu0
  %523 = vmatprep.mubr.bf16.mxu0 0
  %524 = vmatmul.mubr.bf16.gmra.mrb[0].mxu0 %v314
  %v525 = vpop.f32.mrb[0].mxu0
  %v526 = vadd.f32 %v94, %v525
  %v527 = vpop.f32.mrb[0].mxu0
  %v528 = vpop.f32.mrb[0].mxu0
  %v529 = vadd.f32 %v94, %v528
  %v530 = vpop.f32.mrb[0].mxu0
  %531 = vmatprep.mubr.bf16.mxu0 0
  %532 = vmatmul.mubr.bf16.gmra.mrb[0].mxu0 %v317
  %v533 = vpop.f32.mrb[0].mxu0
  %v534 = vadd.f32 %v94, %v533
  %v535 = vpop.f32.mrb[0].mxu0
  %v536 = vpop.f32.mrb[0].mxu0
  %v537 = vadd.f32 %v94, %v536
  %v538 = vpop.f32.mrb[0].mxu0
  %539 = vmatprep.mubr.bf16.mxu0 0
  %540 = vmatmul.mubr.bf16.gmra.mrb[0].mxu0 %v320
  %v541 = vpop.f32.mrb[0].mxu0
  %v542 = vadd.f32 %v94, %v541
  %v543 = vpop.f32.mrb[0].mxu0
  %v544 = vpop.f32.mrb[0].mxu0
  %v545 = vadd.f32 %v94, %v544
  %v546 = vpop.f32.mrb[0].mxu0
  %547 = vmatprep.mubr.bf16.mxu0 0
  %548 = vmatmul.mubr.bf16.gmra.mrb[0].mxu0 %v323
  %v549 = vpop.f32.mrb[0].mxu0
  %v550 = vadd.f32 %v94, %v549
  %v551 = vpop.f32.mrb[0].mxu0
  %v552 = vpop.f32.mrb[0].mxu0
  %v553 = vadd.f32 %v94, %v552
  %v554 = vpop.f32.mrb[0].mxu0
  %555 = vmatprep.mubr.bf16.mxu0 0
  %556 = vmatmul.mubr.bf16.gmra.mrb[0].mxu0 %v326
  %v557 = vpop.f32.mrb[0].mxu0
  %v558 = vadd.f32 %v94, %v557
  %v559 = vpop.f32.mrb[0].mxu0
  %v560 = vpop.f32.mrb[0].mxu0
  %v561 = vadd.f32 %v94, %v560
  %v562 = vpop.f32.mrb[0].mxu0
  %563 = vmatprep.mubr.bf16.mxu0 0
  %564 = vmatmul.mubr.bf16.gmra.mrb[0].mxu0 %v329
  %v565 = vpop.f32.mrb[0].mxu0
  %v566 = vadd.f32 %v94, %v565
  %v567 = vpop.f32.mrb[0].mxu0
  %v568 = vpop.f32.mrb[0].mxu0
  %v569 = vadd.f32 %v94, %v568
  %v570 = vpop.f32.mrb[0].mxu0
  %571 = vmatprep.mubr.bf16.mxu0 0
  %572 = vmatmul.mubr.bf16.gmra.mrb[0].mxu0 %v332
  %v573 = vpop.f32.mrb[0].mxu0
  %v574 = vadd.f32 %v94, %v573
  %v575 = vpop.f32.mrb[0].mxu0
  %v576 = vpop.f32.mrb[0].mxu0
  %v577 = vadd.f32 %v94, %v576
  %v578 = vpop.f32.mrb[0].mxu0
  %579 = vmatprep.mubr.bf16.mxu0 0
  %580 = vmatmul.mubr.bf16.gmra.mrb[0].mxu0 %v335
  %v581 = vpop.f32.mrb[0].mxu0
  %v582 = vadd.f32 %v94, %v581
  %v583 = vpop.f32.mrb[0].mxu0
  %v584 = vpop.f32.mrb[0].mxu0
  %v585 = vadd.f32 %v94, %v584
  %v586 = vpop.f32.mrb[0].mxu0
  %587 = vmatprep.mubr.bf16.mxu0 0
  %588 = vmatmul.mubr.bf16.gmra.mrb[0].mxu0 %v338
  %v589 = vpop.f32.mrb[0].mxu0
  %v590 = vadd.f32 %v94, %v589
  %v591 = vpop.f32.mrb[0].mxu0
  %v592 = vpop.f32.mrb[0].mxu0
  %v593 = vadd.f32 %v94, %v592
  %v594 = vpop.f32.mrb[0].mxu0
  %595 = vmatprep.mubr.bf16.mxu0 0
  %596 = vmatmul.mubr.bf16.gmra.mrb[0].mxu0 %v341
  %v597 = vpop.f32.mrb[0].mxu0
  %v598 = vadd.f32 %v94, %v597
  %v599 = vpop.f32.mrb[0].mxu0
  %v600 = vpop.f32.mrb[0].mxu0
  %v601 = vadd.f32 %v94, %v600
  %v602 = vpop.f32.mrb[0].mxu0
  %603 = vmatprep.mubr.bf16.mxu0 0
  %604 = vmatmul.mubr.bf16.gmra.mrb[0].mxu0 %v344
  %v605 = vpop.f32.mrb[0].mxu0
  %v606 = vadd.f32 %v94, %v605
  %v607 = vpop.f32.mrb[0].mxu0
  %v608 = vpop.f32.mrb[0].mxu0
  %v609 = vadd.f32 %v94, %v608
  %v610 = vpop.f32.mrb[0].mxu0
  %611 = vmatprep.mubr.bf16.mxu0 0
  %612 = vmatmul.mubr.bf16.gmra.mrb[0].mxu0 %v347
  %v613 = vpop.f32.mrb[0].mxu0
  %v614 = vadd.f32 %v94, %v613
  %v615 = vpop.f32.mrb[0].mxu0
  %v616 = vpop.f32.mrb[0].mxu0
  %v617 = vadd.f32 %v94, %v616
  %v618 = vpop.f32.mrb[0].mxu0
  %619 = vmatprep.mubr.bf16.mxu0 0
  %620 = vmatmul.mubr.bf16.gmra.mrb[0].mxu0 %v350
  %v621 = vpop.f32.mrb[0].mxu0
  %v622 = vadd.f32 %v94, %v621
  %v623 = vpop.f32.mrb[0].mxu0
  %v624 = vpop.f32.mrb[0].mxu0
  %v625 = vadd.f32 %v94, %v624
  %v626 = vpop.f32.mrb[0].mxu0
  %627 = vmatprep.mubr.bf16.mxu0 0
  %628 = vmatmul.mubr.bf16.gmra.mrb[0].mxu0 %v353
  %v629 = vpop.f32.mrb[0].mxu0
  %v630 = vadd.f32 %v94, %v629
  %v631 = vpop.f32.mrb[0].mxu0
  %v632 = vpop.f32.mrb[0].mxu0
  %v633 = vadd.f32 %v94, %v632
  %v634 = vpop.f32.mrb[0].mxu0
  %635 = vmatprep.mubr.bf16.mxu0 0
  %636 = vmatmul.mubr.bf16.gmra.mrb[0].mxu0 %v356
  %v637 = vpop.f32.mrb[0].mxu0
  %v638 = vadd.f32 %v94, %v637
  %v639 = vpop.f32.mrb[0].mxu0
  %v640 = vpop.f32.mrb[0].mxu0
  %v641 = vadd.f32 %v94, %v640
  %v642 = vpop.f32.mrb[0].mxu0
  %643 = vmatprep.mubr.bf16.mxu0 0
  %644 = vmatmul.mubr.bf16.gmra.mrb[0].mxu0 %v359
  %v645 = vpop.f32.mrb[0].mxu0
  %v646 = vadd.f32 %v94, %v645
  %v647 = vpop.f32.mrb[0].mxu0
  %v648 = vpop.f32.mrb[0].mxu0
  %v649 = vadd.f32 %v94, %v648
  %v650 = vpop.f32.mrb[0].mxu0
  %651 = vmatprep.mubr.bf16.mxu0 0
  %652 = vmatmul.mubr.bf16.gmra.mrb[0].mxu0 %v362
  %v653 = vpop.f32.mrb[0].mxu0
  %v654 = vadd.f32 %v94, %v653
  %v655 = vpop.f32.mrb[0].mxu0
  %v656 = vpop.f32.mrb[0].mxu0
  %v657 = vadd.f32 %v94, %v656
  %v658 = vpop.f32.mrb[0].mxu0
  %659 = vdwg.mxu0
  %v660 = vmax.f32 %v406, 0.0
  %v661 = vmax.f32 %v409, 0.0
  %v662 = vmax.f32 %v414, 0.0
  %v663 = vmax.f32 %v417, 0.0
  %v664 = vmax.f32 %v422, 0.0
  %v665 = vmax.f32 %v425, 0.0
  %v666 = vmax.f32 %v430, 0.0
  %v667 = vmax.f32 %v433, 0.0
  %v668 = vmax.f32 %v438, 0.0
  %v669 = vmax.f32 %v441, 0.0
  %v670 = vmax.f32 %v446, 0.0
  %v671 = vmax.f32 %v449, 0.0
  %v672 = vmax.f32 %v454, 0.0
  %v673 = vmax.f32 %v457, 0.0
  %v674 = vmax.f32 %v462, 0.0
  %v675 = vmax.f32 %v465, 0.0
  %v676 = vmax.f32 %v470, 0.0
  %v677 = vmax.f32 %v473, 0.0
  %v678 = vmax.f32 %v478, 0.0
  %v679 = vmax.f32 %v481, 0.0
  %v680 = vmax.f32 %v486, 0.0
  %v681 = vmax.f32 %v489, 0.0
  %v682 = vmax.f32 %v494, 0.0
  %v683 = vmax.f32 %v497, 0.0
  %v684 = vmax.f32 %v502, 0.0
  %v685 = vmax.f32 %v505, 0.0
  %v686 = vmax.f32 %v510, 0.0
  %v687 = vmax.f32 %v513, 0.0
  %v688 = vmax.f32 %v518, 0.0
  %v689 = vmax.f32 %v521, 0.0
  %v690 = vmax.f32 %v526, 0.0
  %v691 = vmax.f32 %v529, 0.0
  %v692 = vmax.f32 %v534, 0.0
  %v693 = vmax.f32 %v537, 0.0
  %v694 = vmax.f32 %v542, 0.0
  %v695 = vmax.f32 %v545, 0.0
  %v696 = vmax.f32 %v550, 0.0
  %v697 = vmax.f32 %v553, 0.0
  %v698 = vmax.f32 %v558, 0.0
  %v699 = vmax.f32 %v561, 0.0
  %v700 = vmax.f32 %v566, 0.0
  %v701 = vmax.f32 %v569, 0.0
  %v702 = vmax.f32 %v574, 0.0
  %v703 = vmax.f32 %v577, 0.0
  %v704 = vmax.f32 %v582, 0.0
  %v705 = vmax.f32 %v585, 0.0
  %v706 = vmax.f32 %v590, 0.0
  %v707 = vmax.f32 %v593, 0.0
  %v708 = vmax.f32 %v598, 0.0
  %v709 = vmax.f32 %v601, 0.0
  %v710 = vmax.f32 %v606, 0.0
  %v711 = vmax.f32 %v609, 0.0
  %v712 = vmax.f32 %v614, 0.0
  %v713 = vmax.f32 %v617, 0.0
  %v714 = vmax.f32 %v622, 0.0
  %v715 = vmax.f32 %v625, 0.0
  %v716 = vmax.f32 %v630, 0.0
  %v717 = vmax.f32 %v633, 0.0
  %v718 = vmax.f32 %v638, 0.0
  %v719 = vmax.f32 %v641, 0.0
  %v720 = vmax.f32 %v646, 0.0
  %v721 = vmax.f32 %v649, 0.0
  %v722 = vmax.f32 %v654, 0.0
  %v723 = vmax.f32 %v657, 0.0
  %v724 = vpack.c.bf16 %v661, %v660
  %v725 = vpack.c.bf16 %v663, %v662
  %v726 = vpack.c.bf16 %v665, %v664
  %v727 = vpack.c.bf16 %v667, %v666
  %v728 = vpack.c.bf16 %v669, %v668
  %v729 = vpack.c.bf16 %v671, %v670
  %v730 = vpack.c.bf16 %v673, %v672
  %v731 = vpack.c.bf16 %v675, %v674
  %v732 = vpack.c.bf16 %v677, %v676
  %v733 = vpack.c.bf16 %v679, %v678
  %v734 = vpack.c.bf16 %v681, %v680
  %v735 = vpack.c.bf16 %v683, %v682
  %v736 = vpack.c.bf16 %v685, %v684
  %v737 = vpack.c.bf16 %v687, %v686
  %v738 = vpack.c.bf16 %v689, %v688
  %v739 = vpack.c.bf16 %v691, %v690
  %v740 = vpack.c.bf16 %v693, %v692
  %v741 = vpack.c.bf16 %v695, %v694
  %v742 = vpack.c.bf16 %v697, %v696
  %v743 = vpack.c.bf16 %v699, %v698
  %v744 = vpack.c.bf16 %v701, %v700
  %v745 = vpack.c.bf16 %v703, %v702
  %v746 = vpack.c.bf16 %v705, %v704
  %v747 = vpack.c.bf16 %v707, %v706
  %v748 = vpack.c.bf16 %v709, %v708
  %v749 = vpack.c.bf16 %v711, %v710
  %v750 = vpack.c.bf16 %v713, %v712
  %v751 = vpack.c.bf16 %v715, %v714
  %v752 = vpack.c.bf16 %v717, %v716
  %v753 = vpack.c.bf16 %v719, %v718
  %v754 = vpack.c.bf16 %v721, %v720
  %v755 = vpack.c.bf16 %v723, %v722
  %v756 = vld [vmem:[%s3] sm:$0xf]
  %v757 = vld [vmem:[%s3 + $0x4] sm:$0xf]
  %v758 = vld [vmem:[%s4] sm:$0x1]
  %v760 = vlaneseq
  %v761 = vshrl.u32 %v760, 7
  %v762 = vsub.s32 0, %v761
  %v763 = vrot.slane %v758, %v762
  %v767 = vunpack.c.l.b16 %v756
  %v768 = vunpack.c.l.b16 %v757
  %v769 = vpack.c.b16 %v768, %v767
  %vm771 = vcmask 130048
  %v773 = vsel %vm771, %v724, 0
  %v776 = vsel %vm771, %v725, 0
  %v779 = vsel %vm771, %v726, 0
  %v782 = vsel %vm771, %v727, 0
  %v785 = vsel %vm771, %v728, 0
  %v788 = vsel %vm771, %v729, 0
  %v791 = vsel %vm771, %v730, 0
  %v794 = vsel %vm771, %v731, 0
  %v797 = vsel %vm771, %v732, 0
  %v800 = vsel %vm771, %v733, 0
  %v803 = vsel %vm771, %v734, 0
  %v806 = vsel %vm771, %v735, 0
  %v809 = vsel %vm771, %v736, 0
  %v812 = vsel %vm771, %v737, 0
  %v815 = vsel %vm771, %v738, 0
  %v818 = vsel %vm771, %v739, 0
  %v821 = vsel %vm771, %v740, 0
  %v824 = vsel %vm771, %v741, 0
  %v827 = vsel %vm771, %v742, 0
  %v830 = vsel %vm771, %v743, 0
  %v833 = vsel %vm771, %v744, 0
  %v836 = vsel %vm771, %v745, 0
  %v839 = vsel %vm771, %v746, 0
  %v842 = vsel %vm771, %v747, 0
  %v845 = vsel %vm771, %v748, 0
  %v848 = vsel %vm771, %v749, 0
  %v851 = vsel %vm771, %v750, 0
  %v854 = vsel %vm771, %v751, 0
  %v857 = vsel %vm771, %v752, 0
  %v860 = vsel %vm771, %v753, 0
  %v863 = vsel %vm771, %v754, 0
  %v866 = vsel %vm771, %v755, 0
  %868 = vmatprep.subr.bf16.mxu0 0
  %869 = vmatpush1.bf16.msra.mxu0 %v769
  %870 = vmatprep.subr.bf16.mxu0 0
  %871 = vmatpush1.bf16.msra.mxu0 0
  %872 = vmatprep.subr.bf16.mxu0 0
  %873 = vmatpush1.bf16.msra.mxu0 0
  %874 = vmatprep.subr.bf16.mxu0 0
  %875 = vmatpush1.bf16.msra.mxu0 0
  %876 = vmatprep.subr.bf16.mxu0 0
  %877 = vmatpush1.bf16.msra.mxu0 0
  %878 = vmatprep.subr.bf16.mxu0 0
  %879 = vmatpush1.bf16.msra.mxu0 0
  %880 = vmatprep.subr.bf16.mxu0 0
  %881 = vmatpush1.bf16.msra.mxu0 0
  %882 = vmatprep.subr.bf16.mxu0 0
  %883 = vmatpush1.bf16.msra.mxu0 0
  %884 = vmatprep.subr.bf16.mxu0 0
  %885 = vmatpush1.bf16.msra.mxu0 0
  %886 = vmatprep.subr.bf16.mxu0 0
  %887 = vmatpush1.bf16.msra.mxu0 0
  %888 = vmatprep.subr.bf16.mxu0 0
  %889 = vmatpush1.bf16.msra.mxu0 0
  %890 = vmatprep.subr.bf16.mxu0 0
  %891 = vmatpush1.bf16.msra.mxu0 0
  %892 = vmatprep.subr.bf16.mxu0 0
  %893 = vmatpush1.bf16.msra.mxu0 0
  %894 = vmatprep.subr.bf16.mxu0 0
  %895 = vmatpush1.bf16.msra.mxu0 0
  %896 = vmatprep.subr.bf16.mxu0 0
  %897 = vmatpush1.bf16.msra.mxu0 0
  %898 = vmatprep.subr.bf16.mxu0 0
  %899 = vmatpush1.bf16.msra.mxu0 0
  %900 = vmatprep.mubr.bf16.mxu0 0
  %901 = vmatmul.mubr.bf16.gmra.mrb[0].mxu0 %v773
  %v902 = vpop.f32.mrb[0].mxu0
  %v903 = vadd.f32 %v763, %v902
  %v904 = vpop.f32.mrb[0].mxu0
  %v905 = vpop.f32.mrb[0].mxu0
  %v906 = vadd.f32 %v763, %v905
  %v907 = vpop.f32.mrb[0].mxu0
  %908 = vmatprep.mubr.bf16.mxu0 0
  %909 = vmatmul.mubr.bf16.gmra.mrb[0].mxu0 %v776
  %v910 = vpop.f32.mrb[0].mxu0
  %v911 = vadd.f32 %v763, %v910
  %v912 = vpop.f32.mrb[0].mxu0
  %v913 = vpop.f32.mrb[0].mxu0
  %v914 = vadd.f32 %v763, %v913
  %v915 = vpop.f32.mrb[0].mxu0
  %916 = vmatprep.mubr.bf16.mxu0 0
  %917 = vmatmul.mubr.bf16.gmra.mrb[0].mxu0 %v779
  %v918 = vpop.f32.mrb[0].mxu0
  %v919 = vadd.f32 %v763, %v918
  %v920 = vpop.f32.mrb[0].mxu0
  %v921 = vpop.f32.mrb[0].mxu0
  %v922 = vadd.f32 %v763, %v921
  %v923 = vpop.f32.mrb[0].mxu0
  %924 = vmatprep.mubr.bf16.mxu0 0
  %925 = vmatmul.mubr.bf16.gmra.mrb[0].mxu0 %v782
  %v926 = vpop.f32.mrb[0].mxu0
  %v927 = vadd.f32 %v763, %v926
  %v928 = vpop.f32.mrb[0].mxu0
  %v929 = vpop.f32.mrb[0].mxu0
  %v930 = vadd.f32 %v763, %v929
  %v931 = vpop.f32.mrb[0].mxu0
  %932 = vmatprep.mubr.bf16.mxu0 0
  %933 = vmatmul.mubr.bf16.gmra.mrb[0].mxu0 %v785
  %v934 = vpop.f32.mrb[0].mxu0
  %v935 = vadd.f32 %v763, %v934
  %v936 = vpop.f32.mrb[0].mxu0
  %v937 = vpop.f32.mrb[0].mxu0
  %v938 = vadd.f32 %v763, %v937
  %v939 = vpop.f32.mrb[0].mxu0
  %940 = vmatprep.mubr.bf16.mxu0 0
  %941 = vmatmul.mubr.bf16.gmra.mrb[0].mxu0 %v788
  %v942 = vpop.f32.mrb[0].mxu0
  %v943 = vadd.f32 %v763, %v942
  %v944 = vpop.f32.mrb[0].mxu0
  %v945 = vpop.f32.mrb[0].mxu0
  %v946 = vadd.f32 %v763, %v945
  %v947 = vpop.f32.mrb[0].mxu0
  %948 = vmatprep.mubr.bf16.mxu0 0
  %949 = vmatmul.mubr.bf16.gmra.mrb[0].mxu0 %v791
  %v950 = vpop.f32.mrb[0].mxu0
  %v951 = vadd.f32 %v763, %v950
  %v952 = vpop.f32.mrb[0].mxu0
  %v953 = vpop.f32.mrb[0].mxu0
  %v954 = vadd.f32 %v763, %v953
  %v955 = vpop.f32.mrb[0].mxu0
  %956 = vmatprep.mubr.bf16.mxu0 0
  %957 = vmatmul.mubr.bf16.gmra.mrb[0].mxu0 %v794
  %v958 = vpop.f32.mrb[0].mxu0
  %v959 = vadd.f32 %v763, %v958
  %v960 = vpop.f32.mrb[0].mxu0
  %v961 = vpop.f32.mrb[0].mxu0
  %v962 = vadd.f32 %v763, %v961
  %v963 = vpop.f32.mrb[0].mxu0
  %964 = vmatprep.mubr.bf16.mxu0 0
  %965 = vmatmul.mubr.bf16.gmra.mrb[0].mxu0 %v797
  %v966 = vpop.f32.mrb[0].mxu0
  %v967 = vadd.f32 %v763, %v966
  %v968 = vpop.f32.mrb[0].mxu0
  %v969 = vpop.f32.mrb[0].mxu0
  %v970 = vadd.f32 %v763, %v969
  %v971 = vpop.f32.mrb[0].mxu0
  %972 = vmatprep.mubr.bf16.mxu0 0
  %973 = vmatmul.mubr.bf16.gmra.mrb[0].mxu0 %v800
  %v974 = vpop.f32.mrb[0].mxu0
  %v975 = vadd.f32 %v763, %v974
  %v976 = vpop.f32.mrb[0].mxu0
  %v977 = vpop.f32.mrb[0].mxu0
  %v978 = vadd.f32 %v763, %v977
  %v979 = vpop.f32.mrb[0].mxu0
  %980 = vmatprep.mubr.bf16.mxu0 0
  %981 = vmatmul.mubr.bf16.gmra.mrb[0].mxu0 %v803
  %v982 = vpop.f32.mrb[0].mxu0
  %v983 = vadd.f32 %v763, %v982
  %v984 = vpop.f32.mrb[0].mxu0
  %v985 = vpop.f32.mrb[0].mxu0
  %v986 = vadd.f32 %v763, %v985
  %v987 = vpop.f32.mrb[0].mxu0
  %988 = vmatprep.mubr.bf16.mxu0 0
  %989 = vmatmul.mubr.bf16.gmra.mrb[0].mxu0 %v806
  %v990 = vpop.f32.mrb[0].mxu0
  %v991 = vadd.f32 %v763, %v990
  %v992 = vpop.f32.mrb[0].mxu0
  %v993 = vpop.f32.mrb[0].mxu0
  %v994 = vadd.f32 %v763, %v993
  %v995 = vpop.f32.mrb[0].mxu0
  %996 = vmatprep.mubr.bf16.mxu0 0
  %997 = vmatmul.mubr.bf16.gmra.mrb[0].mxu0 %v809
  %v998 = vpop.f32.mrb[0].mxu0
  %v999 = vadd.f32 %v763, %v998
  %v1000 = vpop.f32.mrb[0].mxu0
  %v1001 = vpop.f32.mrb[0].mxu0
  %v1002 = vadd.f32 %v763, %v1001
  %v1003 = vpop.f32.mrb[0].mxu0
  %1004 = vmatprep.mubr.bf16.mxu0 0
  %1005 = vmatmul.mubr.bf16.gmra.mrb[0].mxu0 %v812
  %v1006 = vpop.f32.mrb[0].mxu0
  %v1007 = vadd.f32 %v763, %v1006
  %v1008 = vpop.f32.mrb[0].mxu0
  %v1009 = vpop.f32.mrb[0].mxu0
  %v1010 = vadd.f32 %v763, %v1009
  %v1011 = vpop.f32.mrb[0].mxu0
  %1012 = vmatprep.mubr.bf16.mxu0 0
  %1013 = vmatmul.mubr.bf16.gmra.mrb[0].mxu0 %v815
  %v1014 = vpop.f32.mrb[0].mxu0
  %v1015 = vadd.f32 %v763, %v1014
  %v1016 = vpop.f32.mrb[0].mxu0
  %v1017 = vpop.f32.mrb[0].mxu0
  %v1018 = vadd.f32 %v763, %v1017
  %v1019 = vpop.f32.mrb[0].mxu0
  %1020 = vmatprep.mubr.bf16.mxu0 0
  %1021 = vmatmul.mubr.bf16.gmra.mrb[0].mxu0 %v818
  %v1022 = vpop.f32.mrb[0].mxu0
  %v1023 = vadd.f32 %v763, %v1022
  %v1024 = vpop.f32.mrb[0].mxu0
  %v1025 = vpop.f32.mrb[0].mxu0
  %v1026 = vadd.f32 %v763, %v1025
  %v1027 = vpop.f32.mrb[0].mxu0
  %1028 = vmatprep.mubr.bf16.mxu0 0
  %1029 = vmatmul.mubr.bf16.gmra.mrb[0].mxu0 %v821
  %v1030 = vpop.f32.mrb[0].mxu0
  %v1031 = vadd.f32 %v763, %v1030
  %v1032 = vpop.f32.mrb[0].mxu0
  %v1033 = vpop.f32.mrb[0].mxu0
  %v1034 = vadd.f32 %v763, %v1033
  %v1035 = vpop.f32.mrb[0].mxu0
  %1036 = vmatprep.mubr.bf16.mxu0 0
  %1037 = vmatmul.mubr.bf16.gmra.mrb[0].mxu0 %v824
  %v1038 = vpop.f32.mrb[0].mxu0
  %v1039 = vadd.f32 %v763, %v1038
  %v1040 = vpop.f32.mrb[0].mxu0
  %v1041 = vpop.f32.mrb[0].mxu0
  %v1042 = vadd.f32 %v763, %v1041
  %v1043 = vpop.f32.mrb[0].mxu0
  %1044 = vmatprep.mubr.bf16.mxu0 0
  %1045 = vmatmul.mubr.bf16.gmra.mrb[0].mxu0 %v827
  %v1046 = vpop.f32.mrb[0].mxu0
  %v1047 = vadd.f32 %v763, %v1046
  %v1048 = vpop.f32.mrb[0].mxu0
  %v1049 = vpop.f32.mrb[0].mxu0
  %v1050 = vadd.f32 %v763, %v1049
  %v1051 = vpop.f32.mrb[0].mxu0
  %1052 = vmatprep.mubr.bf16.mxu0 0
  %1053 = vmatmul.mubr.bf16.gmra.mrb[0].mxu0 %v830
  %v1054 = vpop.f32.mrb[0].mxu0
  %v1055 = vadd.f32 %v763, %v1054
  %v1056 = vpop.f32.mrb[0].mxu0
  %v1057 = vpop.f32.mrb[0].mxu0
  %v1058 = vadd.f32 %v763, %v1057
  %v1059 = vpop.f32.mrb[0].mxu0
  %1060 = vmatprep.mubr.bf16.mxu0 0
  %1061 = vmatmul.mubr.bf16.gmra.mrb[0].mxu0 %v833
  %v1062 = vpop.f32.mrb[0].mxu0
  %v1063 = vadd.f32 %v763, %v1062
  %v1064 = vpop.f32.mrb[0].mxu0
  %v1065 = vpop.f32.mrb[0].mxu0
  %v1066 = vadd.f32 %v763, %v1065
  %v1067 = vpop.f32.mrb[0].mxu0
  %1068 = vmatprep.mubr.bf16.mxu0 0
  %1069 = vmatmul.mubr.bf16.gmra.mrb[0].mxu0 %v836
  %v1070 = vpop.f32.mrb[0].mxu0
  %v1071 = vadd.f32 %v763, %v1070
  %v1072 = vpop.f32.mrb[0].mxu0
  %v1073 = vpop.f32.mrb[0].mxu0
  %v1074 = vadd.f32 %v763, %v1073
  %v1075 = vpop.f32.mrb[0].mxu0
  %1076 = vmatprep.mubr.bf16.mxu0 0
  %1077 = vmatmul.mubr.bf16.gmra.mrb[0].mxu0 %v839
  %v1078 = vpop.f32.mrb[0].mxu0
  %v1079 = vadd.f32 %v763, %v1078
  %v1080 = vpop.f32.mrb[0].mxu0
  %v1081 = vpop.f32.mrb[0].mxu0
  %v1082 = vadd.f32 %v763, %v1081
  %v1083 = vpop.f32.mrb[0].mxu0
  %1084 = vmatprep.mubr.bf16.mxu0 0
  %1085 = vmatmul.mubr.bf16.gmra.mrb[0].mxu0 %v842
  %v1086 = vpop.f32.mrb[0].mxu0
  %v1087 = vadd.f32 %v763, %v1086
  %v1088 = vpop.f32.mrb[0].mxu0
  %v1089 = vpop.f32.mrb[0].mxu0
  %v1090 = vadd.f32 %v763, %v1089
  %v1091 = vpop.f32.mrb[0].mxu0
  %1092 = vmatprep.mubr.bf16.mxu0 0
  %1093 = vmatmul.mubr.bf16.gmra.mrb[0].mxu0 %v845
  %v1094 = vpop.f32.mrb[0].mxu0
  %v1095 = vadd.f32 %v763, %v1094
  %v1096 = vpop.f32.mrb[0].mxu0
  %v1097 = vpop.f32.mrb[0].mxu0
  %v1098 = vadd.f32 %v763, %v1097
  %v1099 = vpop.f32.mrb[0].mxu0
  %1100 = vmatprep.mubr.bf16.mxu0 0
  %1101 = vmatmul.mubr.bf16.gmra.mrb[0].mxu0 %v848
  %v1102 = vpop.f32.mrb[0].mxu0
  %v1103 = vadd.f32 %v763, %v1102
  %v1104 = vpop.f32.mrb[0].mxu0
  %v1105 = vpop.f32.mrb[0].mxu0
  %v1106 = vadd.f32 %v763, %v1105
  %v1107 = vpop.f32.mrb[0].mxu0
  %1108 = vmatprep.mubr.bf16.mxu0 0
  %1109 = vmatmul.mubr.bf16.gmra.mrb[0].mxu0 %v851
  %v1110 = vpop.f32.mrb[0].mxu0
  %v1111 = vadd.f32 %v763, %v1110
  %v1112 = vpop.f32.mrb[0].mxu0
  %v1113 = vpop.f32.mrb[0].mxu0
  %v1114 = vadd.f32 %v763, %v1113
  %v1115 = vpop.f32.mrb[0].mxu0
  %1116 = vmatprep.mubr.bf16.mxu0 0
  %1117 = vmatmul.mubr.bf16.gmra.mrb[0].mxu0 %v854
  %v1118 = vpop.f32.mrb[0].mxu0
  %v1119 = vadd.f32 %v763, %v1118
  %v1120 = vpop.f32.mrb[0].mxu0
  %v1121 = vpop.f32.mrb[0].mxu0
  %v1122 = vadd.f32 %v763, %v1121
  %v1123 = vpop.f32.mrb[0].mxu0
  %1124 = vmatprep.mubr.bf16.mxu0 0
  %1125 = vmatmul.mubr.bf16.gmra.mrb[0].mxu0 %v857
  %v1126 = vpop.f32.mrb[0].mxu0
  %v1127 = vadd.f32 %v763, %v1126
  %v1128 = vpop.f32.mrb[0].mxu0
  %v1129 = vpop.f32.mrb[0].mxu0
  %v1130 = vadd.f32 %v763, %v1129
  %v1131 = vpop.f32.mrb[0].mxu0
  %1132 = vmatprep.mubr.bf16.mxu0 0
  %1133 = vmatmul.mubr.bf16.gmra.mrb[0].mxu0 %v860
  %v1134 = vpop.f32.mrb[0].mxu0
  %v1135 = vadd.f32 %v763, %v1134
  %v1136 = vpop.f32.mrb[0].mxu0
  %v1137 = vpop.f32.mrb[0].mxu0
  %v1138 = vadd.f32 %v763, %v1137
  %v1139 = vpop.f32.mrb[0].mxu0
  %1140 = vmatprep.mubr.bf16.mxu0 0
  %1141 = vmatmul.mubr.bf16.gmra.mrb[0].mxu0 %v863
  %v1142 = vpop.f32.mrb[0].mxu0
  %v1143 = vadd.f32 %v763, %v1142
  %v1144 = vpop.f32.mrb[0].mxu0
  %v1145 = vpop.f32.mrb[0].mxu0
  %v1146 = vadd.f32 %v763, %v1145
  %v1147 = vpop.f32.mrb[0].mxu0
  %1148 = vmatprep.mubr.bf16.mxu0 0
  %1149 = vmatmul.mubr.bf16.gmra.mrb[0].mxu0 %v866
  %v1150 = vpop.f32.mrb[0].mxu0
  %v1151 = vadd.f32 %v763, %v1150
  %v1152 = vpop.f32.mrb[0].mxu0
  %v1153 = vpop.f32.mrb[0].mxu0
  %v1154 = vadd.f32 %v763, %v1153
  %v1155 = vpop.f32.mrb[0].mxu0
  %1156 = vdwg.mxu0
  %v1157 = vlaneseq
  %v1158 = vand.u32 %v1157, 127
  %vm1159 = vcmp.lt.s32.totalorder %v1158, 32
  %v1160 = vmax.f32 %v903, 0.0
  %v1161 = vmax.f32 %v906, 0.0
  %v1162 = vmax.f32 %v911, 0.0
  %v1163 = vmax.f32 %v914, 0.0
  %v1164 = vmax.f32 %v919, 0.0
  %v1165 = vmax.f32 %v922, 0.0
  %v1166 = vmax.f32 %v927, 0.0
  %v1167 = vmax.f32 %v930, 0.0
  %v1168 = vmax.f32 %v935, 0.0
  %v1169 = vmax.f32 %v938, 0.0
  %v1170 = vmax.f32 %v943, 0.0
  %v1171 = vmax.f32 %v946, 0.0
  %v1172 = vmax.f32 %v951, 0.0
  %v1173 = vmax.f32 %v954, 0.0
  %v1174 = vmax.f32 %v959, 0.0
  %v1175 = vmax.f32 %v962, 0.0
  %v1176 = vmax.f32 %v967, 0.0
  %v1177 = vmax.f32 %v970, 0.0
  %v1178 = vmax.f32 %v975, 0.0
  %v1179 = vmax.f32 %v978, 0.0
  %v1180 = vmax.f32 %v983, 0.0
  %v1181 = vmax.f32 %v986, 0.0
  %v1182 = vmax.f32 %v991, 0.0
  %v1183 = vmax.f32 %v994, 0.0
  %v1184 = vmax.f32 %v999, 0.0
  %v1185 = vmax.f32 %v1002, 0.0
  %v1186 = vmax.f32 %v1007, 0.0
  %v1187 = vmax.f32 %v1010, 0.0
  %v1188 = vmax.f32 %v1015, 0.0
  %v1189 = vmax.f32 %v1018, 0.0
  %v1190 = vmax.f32 %v1023, 0.0
  %v1191 = vmax.f32 %v1026, 0.0
  %v1192 = vmax.f32 %v1031, 0.0
  %v1193 = vmax.f32 %v1034, 0.0
  %v1194 = vmax.f32 %v1039, 0.0
  %v1195 = vmax.f32 %v1042, 0.0
  %v1196 = vmax.f32 %v1047, 0.0
  %v1197 = vmax.f32 %v1050, 0.0
  %v1198 = vmax.f32 %v1055, 0.0
  %v1199 = vmax.f32 %v1058, 0.0
  %v1200 = vmax.f32 %v1063, 0.0
  %v1201 = vmax.f32 %v1066, 0.0
  %v1202 = vmax.f32 %v1071, 0.0
  %v1203 = vmax.f32 %v1074, 0.0
  %v1204 = vmax.f32 %v1079, 0.0
  %v1205 = vmax.f32 %v1082, 0.0
  %v1206 = vmax.f32 %v1087, 0.0
  %v1207 = vmax.f32 %v1090, 0.0
  %v1208 = vmax.f32 %v1095, 0.0
  %v1209 = vmax.f32 %v1098, 0.0
  %v1210 = vmax.f32 %v1103, 0.0
  %v1211 = vmax.f32 %v1106, 0.0
  %v1212 = vmax.f32 %v1111, 0.0
  %v1213 = vmax.f32 %v1114, 0.0
  %v1214 = vmax.f32 %v1119, 0.0
  %v1215 = vmax.f32 %v1122, 0.0
  %v1216 = vmax.f32 %v1127, 0.0
  %v1217 = vmax.f32 %v1130, 0.0
  %v1218 = vmax.f32 %v1135, 0.0
  %v1219 = vmax.f32 %v1138, 0.0
  %v1220 = vmax.f32 %v1143, 0.0
  %v1221 = vmax.f32 %v1146, 0.0
  %v1222 = vmax.f32 %v1151, 0.0
  %v1223 = vmax.f32 %v1154, 0.0
  %v1224 = vsel %vm1159, %v1160, %v903
  %v1225 = vsel %vm1159, %v1161, %v906
  %v1226 = vsel %vm1159, %v1162, %v911
  %v1227 = vsel %vm1159, %v1163, %v914
  %v1228 = vsel %vm1159, %v1164, %v919
  %v1229 = vsel %vm1159, %v1165, %v922
  %v1230 = vsel %vm1159, %v1166, %v927
  %v1231 = vsel %vm1159, %v1167, %v930
  %v1232 = vsel %vm1159, %v1168, %v935
  %v1233 = vsel %vm1159, %v1169, %v938
  %v1234 = vsel %vm1159, %v1170, %v943
  %v1235 = vsel %vm1159, %v1171, %v946
  %v1236 = vsel %vm1159, %v1172, %v951
  %v1237 = vsel %vm1159, %v1173, %v954
  %v1238 = vsel %vm1159, %v1174, %v959
  %v1239 = vsel %vm1159, %v1175, %v962
  %v1240 = vsel %vm1159, %v1176, %v967
  %v1241 = vsel %vm1159, %v1177, %v970
  %v1242 = vsel %vm1159, %v1178, %v975
  %v1243 = vsel %vm1159, %v1179, %v978
  %v1244 = vsel %vm1159, %v1180, %v983
  %v1245 = vsel %vm1159, %v1181, %v986
  %v1246 = vsel %vm1159, %v1182, %v991
  %v1247 = vsel %vm1159, %v1183, %v994
  %v1248 = vsel %vm1159, %v1184, %v999
  %v1249 = vsel %vm1159, %v1185, %v1002
  %v1250 = vsel %vm1159, %v1186, %v1007
  %v1251 = vsel %vm1159, %v1187, %v1010
  %v1252 = vsel %vm1159, %v1188, %v1015
  %v1253 = vsel %vm1159, %v1189, %v1018
  %v1254 = vsel %vm1159, %v1190, %v1023
  %v1255 = vsel %vm1159, %v1191, %v1026
  %v1256 = vsel %vm1159, %v1192, %v1031
  %v1257 = vsel %vm1159, %v1193, %v1034
  %v1258 = vsel %vm1159, %v1194, %v1039
  %v1259 = vsel %vm1159, %v1195, %v1042
  %v1260 = vsel %vm1159, %v1196, %v1047
  %v1261 = vsel %vm1159, %v1197, %v1050
  %v1262 = vsel %vm1159, %v1198, %v1055
  %v1263 = vsel %vm1159, %v1199, %v1058
  %v1264 = vsel %vm1159, %v1200, %v1063
  %v1265 = vsel %vm1159, %v1201, %v1066
  %v1266 = vsel %vm1159, %v1202, %v1071
  %v1267 = vsel %vm1159, %v1203, %v1074
  %v1268 = vsel %vm1159, %v1204, %v1079
  %v1269 = vsel %vm1159, %v1205, %v1082
  %v1270 = vsel %vm1159, %v1206, %v1087
  %v1271 = vsel %vm1159, %v1207, %v1090
  %v1272 = vsel %vm1159, %v1208, %v1095
  %v1273 = vsel %vm1159, %v1209, %v1098
  %v1274 = vsel %vm1159, %v1210, %v1103
  %v1275 = vsel %vm1159, %v1211, %v1106
  %v1276 = vsel %vm1159, %v1212, %v1111
  %v1277 = vsel %vm1159, %v1213, %v1114
  %v1278 = vsel %vm1159, %v1214, %v1119
  %v1279 = vsel %vm1159, %v1215, %v1122
  %v1280 = vsel %vm1159, %v1216, %v1127
  %v1281 = vsel %vm1159, %v1217, %v1130
  %v1282 = vsel %vm1159, %v1218, %v1135
  %v1283 = vsel %vm1159, %v1219, %v1138
  %v1284 = vsel %vm1159, %v1220, %v1143
  %v1285 = vsel %vm1159, %v1221, %v1146
  %v1286 = vsel %vm1159, %v1222, %v1151
  %v1287 = vsel %vm1159, %v1223, %v1154
  %v1288 = vpack.c.bf16 %v1225, %v1224
  %v1289 = vpack.c.bf16 %v1227, %v1226
  %v1290 = vpack.c.bf16 %v1229, %v1228
  %v1291 = vpack.c.bf16 %v1231, %v1230
  %v1292 = vpack.c.bf16 %v1233, %v1232
  %v1293 = vpack.c.bf16 %v1235, %v1234
  %v1294 = vpack.c.bf16 %v1237, %v1236
  %v1295 = vpack.c.bf16 %v1239, %v1238
  %v1296 = vpack.c.bf16 %v1241, %v1240
  %v1297 = vpack.c.bf16 %v1243, %v1242
  %v1298 = vpack.c.bf16 %v1245, %v1244
  %v1299 = vpack.c.bf16 %v1247, %v1246
  %v1300 = vpack.c.bf16 %v1249, %v1248
  %v1301 = vpack.c.bf16 %v1251, %v1250
  %v1302 = vpack.c.bf16 %v1253, %v1252
  %v1303 = vpack.c.bf16 %v1255, %v1254
  %v1304 = vpack.c.bf16 %v1257, %v1256
  %v1305 = vpack.c.bf16 %v1259, %v1258
  %v1306 = vpack.c.bf16 %v1261, %v1260
  %v1307 = vpack.c.bf16 %v1263, %v1262
  %v1308 = vpack.c.bf16 %v1265, %v1264
  %v1309 = vpack.c.bf16 %v1267, %v1266
  %v1310 = vpack.c.bf16 %v1269, %v1268
  %v1311 = vpack.c.bf16 %v1271, %v1270
  %v1312 = vpack.c.bf16 %v1273, %v1272
  %v1313 = vpack.c.bf16 %v1275, %v1274
  %v1314 = vpack.c.bf16 %v1277, %v1276
  %v1315 = vpack.c.bf16 %v1279, %v1278
  %v1316 = vpack.c.bf16 %v1281, %v1280
  %v1317 = vpack.c.bf16 %v1283, %v1282
  %v1318 = vpack.c.bf16 %v1285, %v1284
  %v1319 = vpack.c.bf16 %v1287, %v1286
  %v1352 = vunpack.c.l.b16 %v1288
  %v1353 = vunpack.c.h.b16 %v1288
  %v1354 = vunpack.c.l.b16 %v1289
  %v1355 = vunpack.c.h.b16 %v1289
  %v1356 = vunpack.c.l.b16 %v1290
  %v1357 = vunpack.c.h.b16 %v1290
  %v1358 = vunpack.c.l.b16 %v1291
  %v1359 = vunpack.c.h.b16 %v1291
  %v1360 = vunpack.c.l.b16 %v1292
  %v1361 = vunpack.c.h.b16 %v1292
  %v1362 = vunpack.c.l.b16 %v1293
  %v1363 = vunpack.c.h.b16 %v1293
  %v1364 = vunpack.c.l.b16 %v1294
  %v1365 = vunpack.c.h.b16 %v1294
  %v1366 = vunpack.c.l.b16 %v1295
  %v1367 = vunpack.c.h.b16 %v1295
  %v1368 = vunpack.c.l.b16 %v1296
  %v1369 = vunpack.c.h.b16 %v1296
  %v1370 = vunpack.c.l.b16 %v1297
  %v1371 = vunpack.c.h.b16 %v1297
  %v1372 = vunpack.c.l.b16 %v1298
  %v1373 = vunpack.c.h.b16 %v1298
  %v1374 = vunpack.c.l.b16 %v1299
  %v1375 = vunpack.c.h.b16 %v1299
  %v1376 = vunpack.c.l.b16 %v1300
  %v1377 = vunpack.c.h.b16 %v1300
  %v1378 = vunpack.c.l.b16 %v1301
  %v1379 = vunpack.c.h.b16 %v1301
  %v1380 = vunpack.c.l.b16 %v1302
  %v1381 = vunpack.c.h.b16 %v1302
  %v1382 = vunpack.c.l.b16 %v1303
  %v1383 = vunpack.c.h.b16 %v1303
  %v1384 = vunpack.c.l.b16 %v1304
  %v1385 = vunpack.c.h.b16 %v1304
  %v1386 = vunpack.c.l.b16 %v1305
  %v1387 = vunpack.c.h.b16 %v1305
  %v1388 = vunpack.c.l.b16 %v1306
  %v1389 = vunpack.c.h.b16 %v1306
  %v1390 = vunpack.c.l.b16 %v1307
  %v1391 = vunpack.c.h.b16 %v1307
  %v1392 = vunpack.c.l.b16 %v1308
  %v1393 = vunpack.c.h.b16 %v1308
  %v1394 = vunpack.c.l.b16 %v1309
  %v1395 = vunpack.c.h.b16 %v1309
  %v1396 = vunpack.c.l.b16 %v1310
  %v1397 = vunpack.c.h.b16 %v1310
  %v1398 = vunpack.c.l.b16 %v1311
  %v1399 = vunpack.c.h.b16 %v1311
  %v1400 = vunpack.c.l.b16 %v1312
  %v1401 = vunpack.c.h.b16 %v1312
  %v1402 = vunpack.c.l.b16 %v1313
  %v1403 = vunpack.c.h.b16 %v1313
  %v1404 = vunpack.c.l.b16 %v1314
  %v1405 = vunpack.c.h.b16 %v1314
  %v1406 = vunpack.c.l.b16 %v1315
  %v1407 = vunpack.c.h.b16 %v1315
  %v1408 = vunpack.c.l.b16 %v1316
  %v1409 = vunpack.c.h.b16 %v1316
  %v1410 = vunpack.c.l.b16 %v1317
  %v1411 = vunpack.c.h.b16 %v1317
  %v1412 = vunpack.c.l.b16 %v1318
  %v1413 = vunpack.c.h.b16 %v1318
  %v1414 = vunpack.c.l.b16 %v1319
  %v1415 = vunpack.c.h.b16 %v1319
  %v1416 = vpack.c.b16 %v1352, %v1352
  %v1417 = vpack.c.b16 %v1353, %v1353
  %v1418 = vpack.c.b16 %v1354, %v1354
  %v1419 = vpack.c.b16 %v1355, %v1355
  %v1420 = vpack.c.b16 %v1356, %v1356
  %v1421 = vpack.c.b16 %v1357, %v1357
  %v1422 = vpack.c.b16 %v1358, %v1358
  %v1423 = vpack.c.b16 %v1359, %v1359
  %v1424 = vpack.c.b16 %v1360, %v1360
  %v1425 = vpack.c.b16 %v1361, %v1361
  %v1426 = vpack.c.b16 %v1362, %v1362
  %v1427 = vpack.c.b16 %v1363, %v1363
  %v1428 = vpack.c.b16 %v1364, %v1364
  %v1429 = vpack.c.b16 %v1365, %v1365
  %v1430 = vpack.c.b16 %v1366, %v1366
  %v1431 = vpack.c.b16 %v1367, %v1367
  %v1432 = vpack.c.b16 %v1368, %v1368
  %v1433 = vpack.c.b16 %v1369, %v1369
  %v1434 = vpack.c.b16 %v1370, %v1370
  %v1435 = vpack.c.b16 %v1371, %v1371
  %v1436 = vpack.c.b16 %v1372, %v1372
  %v1437 = vpack.c.b16 %v1373, %v1373
  %v1438 = vpack.c.b16 %v1374, %v1374
  %v1439 = vpack.c.b16 %v1375, %v1375
  %v1440 = vpack.c.b16 %v1376, %v1376
  %v1441 = vpack.c.b16 %v1377, %v1377
  %v1442 = vpack.c.b16 %v1378, %v1378
  %v1443 = vpack.c.b16 %v1379, %v1379
  %v1444 = vpack.c.b16 %v1380, %v1380
  %v1445 = vpack.c.b16 %v1381, %v1381
  %v1446 = vpack.c.b16 %v1382, %v1382
  %v1447 = vpack.c.b16 %v1383, %v1383
  %v1448 = vpack.c.b16 %v1384, %v1384
  %v1449 = vpack.c.b16 %v1385, %v1385
  %v1450 = vpack.c.b16 %v1386, %v1386
  %v1451 = vpack.c.b16 %v1387, %v1387
  %v1452 = vpack.c.b16 %v1388, %v1388
  %v1453 = vpack.c.b16 %v1389, %v1389
  %v1454 = vpack.c.b16 %v1390, %v1390
  %v1455 = vpack.c.b16 %v1391, %v1391
  %v1456 = vpack.c.b16 %v1392, %v1392
  %v1457 = vpack.c.b16 %v1393, %v1393
  %v1458 = vpack.c.b16 %v1394, %v1394
  %v1459 = vpack.c.b16 %v1395, %v1395
  %v1460 = vpack.c.b16 %v1396, %v1396
  %v1461 = vpack.c.b16 %v1397, %v1397
  %v1462 = vpack.c.b16 %v1398, %v1398
  %v1463 = vpack.c.b16 %v1399, %v1399
  %v1464 = vpack.c.b16 %v1400, %v1400
  %v1465 = vpack.c.b16 %v1401, %v1401
  %v1466 = vpack.c.b16 %v1402, %v1402
  %v1467 = vpack.c.b16 %v1403, %v1403
  %v1468 = vpack.c.b16 %v1404, %v1404
  %v1469 = vpack.c.b16 %v1405, %v1405
  %v1470 = vpack.c.b16 %v1406, %v1406
  %v1471 = vpack.c.b16 %v1407, %v1407
  %v1472 = vpack.c.b16 %v1408, %v1408
  %v1473 = vpack.c.b16 %v1409, %v1409
  %v1474 = vpack.c.b16 %v1410, %v1410
  %v1475 = vpack.c.b16 %v1411, %v1411
  %v1476 = vpack.c.b16 %v1412, %v1412
  %v1477 = vpack.c.b16 %v1413, %v1413
  %v1478 = vpack.c.b16 %v1414, %v1414
  %v1479 = vpack.c.b16 %v1415, %v1415
  %vm1544 = vcmask 519168
  %1545 = vst.msk [vmem:[%s5] sm:$0xf] %vm1544, %v1416
  %1546 = vst.msk [vmem:[%s5 + $0x4] sm:$0xf] %vm1544, %v1417
  %1547 = vst.msk [vmem:[%s5 + $0x8] sm:$0xf] %vm1544, %v1418
  %1548 = vst.msk [vmem:[%s5 + $0xc] sm:$0xf] %vm1544, %v1419
  %1549 = vst.msk [vmem:[%s5 + $0x10] sm:$0xf] %vm1544, %v1420
  %1550 = vst.msk [vmem:[%s5 + $0x14] sm:$0xf] %vm1544, %v1421
  %1551 = vst.msk [vmem:[%s5 + $0x18] sm:$0xf] %vm1544, %v1422
  %1552 = vst.msk [vmem:[%s5 + $0x1c] sm:$0xf] %vm1544, %v1423
  %1553 = vst.msk [vmem:[%s5 + $0x20] sm:$0xf] %vm1544, %v1424
  %1554 = vst.msk [vmem:[%s5 + $0x24] sm:$0xf] %vm1544, %v1425
  %1555 = vst.msk [vmem:[%s5 + $0x28] sm:$0xf] %vm1544, %v1426
  %1556 = vst.msk [vmem:[%s5 + $0x2c] sm:$0xf] %vm1544, %v1427
  %1557 = vst.msk [vmem:[%s5 + $0x30] sm:$0xf] %vm1544, %v1428
  %1558 = vst.msk [vmem:[%s5 + $0x34] sm:$0xf] %vm1544, %v1429
  %1559 = vst.msk [vmem:[%s5 + $0x38] sm:$0xf] %vm1544, %v1430
  %1560 = vst.msk [vmem:[%s5 + $0x3c] sm:$0xf] %vm1544, %v1431
  %1561 = vst.msk [vmem:[%s5 + $0x40] sm:$0xf] %vm1544, %v1432
  %1562 = vst.msk [vmem:[%s5 + $0x44] sm:$0xf] %vm1544, %v1433
  %1563 = vst.msk [vmem:[%s5 + $0x48] sm:$0xf] %vm1544, %v1434
  %1564 = vst.msk [vmem:[%s5 + $0x4c] sm:$0xf] %vm1544, %v1435
  %1565 = vst.msk [vmem:[%s5 + $0x50] sm:$0xf] %vm1544, %v1436
  %1566 = vst.msk [vmem:[%s5 + $0x54] sm:$0xf] %vm1544, %v1437
  %1567 = vst.msk [vmem:[%s5 + $0x58] sm:$0xf] %vm1544, %v1438
  %1568 = vst.msk [vmem:[%s5 + $0x5c] sm:$0xf] %vm1544, %v1439
  %1569 = vst.msk [vmem:[%s5 + $0x60] sm:$0xf] %vm1544, %v1440
  %1570 = vst.msk [vmem:[%s5 + $0x64] sm:$0xf] %vm1544, %v1441
  %1571 = vst.msk [vmem:[%s5 + $0x68] sm:$0xf] %vm1544, %v1442
  %1572 = vst.msk [vmem:[%s5 + $0x6c] sm:$0xf] %vm1544, %v1443
  %1573 = vst.msk [vmem:[%s5 + $0x70] sm:$0xf] %vm1544, %v1444
  %1574 = vst.msk [vmem:[%s5 + $0x74] sm:$0xf] %vm1544, %v1445
  %1575 = vst.msk [vmem:[%s5 + $0x78] sm:$0xf] %vm1544, %v1446
  %1576 = vst.msk [vmem:[%s5 + $0x7c] sm:$0xf] %vm1544, %v1447
  %1577 = vst.msk [vmem:[%s5 + $0x80] sm:$0xf] %vm1544, %v1448
  %1578 = vst.msk [vmem:[%s5 + $0x84] sm:$0xf] %vm1544, %v1449
  %1579 = vst.msk [vmem:[%s5 + $0x88] sm:$0xf] %vm1544, %v1450
  %1580 = vst.msk [vmem:[%s5 + $0x8c] sm:$0xf] %vm1544, %v1451
  %1581 = vst.msk [vmem:[%s5 + $0x90] sm:$0xf] %vm1544, %v1452
  %1582 = vst.msk [vmem:[%s5 + $0x94] sm:$0xf] %vm1544, %v1453
  %1583 = vst.msk [vmem:[%s5 + $0x98] sm:$0xf] %vm1544, %v1454
  %1584 = vst.msk [vmem:[%s5 + $0x9c] sm:$0xf] %vm1544, %v1455
  %1585 = vst.msk [vmem:[%s5 + $0xa0] sm:$0xf] %vm1544, %v1456
  %1586 = vst.msk [vmem:[%s5 + $0xa4] sm:$0xf] %vm1544, %v1457
  %1587 = vst.msk [vmem:[%s5 + $0xa8] sm:$0xf] %vm1544, %v1458
  %1588 = vst.msk [vmem:[%s5 + $0xac] sm:$0xf] %vm1544, %v1459
  %1589 = vst.msk [vmem:[%s5 + $0xb0] sm:$0xf] %vm1544, %v1460
  %1590 = vst.msk [vmem:[%s5 + $0xb4] sm:$0xf] %vm1544, %v1461
  %1591 = vst.msk [vmem:[%s5 + $0xb8] sm:$0xf] %vm1544, %v1462
  %1592 = vst.msk [vmem:[%s5 + $0xbc] sm:$0xf] %vm1544, %v1463
  %1593 = vst.msk [vmem:[%s5 + $0xc0] sm:$0xf] %vm1544, %v1464
  %1594 = vst.msk [vmem:[%s5 + $0xc4] sm:$0xf] %vm1544, %v1465
  %1595 = vst.msk [vmem:[%s5 + $0xc8] sm:$0xf] %vm1544, %v1466
  %1596 = vst.msk [vmem:[%s5 + $0xcc] sm:$0xf] %vm1544, %v1467
  %1597 = vst.msk [vmem:[%s5 + $0xd0] sm:$0xf] %vm1544, %v1468
  %1598 = vst.msk [vmem:[%s5 + $0xd4] sm:$0xf] %vm1544, %v1469
  %1599 = vst.msk [vmem:[%s5 + $0xd8] sm:$0xf] %vm1544, %v1470
  %1600 = vst.msk [vmem:[%s5 + $0xdc] sm:$0xf] %vm1544, %v1471
  %1601 = vst.msk [vmem:[%s5 + $0xe0] sm:$0xf] %vm1544, %v1472
  %1602 = vst.msk [vmem:[%s5 + $0xe4] sm:$0xf] %vm1544, %v1473
  %1603 = vst.msk [vmem:[%s5 + $0xe8] sm:$0xf] %vm1544, %v1474
  %1604 = vst.msk [vmem:[%s5 + $0xec] sm:$0xf] %vm1544, %v1475
  %1605 = vst.msk [vmem:[%s5 + $0xf0] sm:$0xf] %vm1544, %v1476
  %1606 = vst.msk [vmem:[%s5 + $0xf4] sm:$0xf] %vm1544, %v1477
  %1607 = vst.msk [vmem:[%s5 + $0xf8] sm:$0xf] %vm1544, %v1478
  %1608 = vst.msk [vmem:[%s5 + $0xfc] sm:$0xf] %vm1544, %v1479
  // Predicated region
  $region22: #{_lambda_.2} parent=0 // pred_check
    _
  $region23: #{_lambda_.2} parent=0 // pred_check_branch
    %1610 = sbr.rel (0) target = $region25
  $region24: #{_lambda_.2} parent=0 // pred_region
    _
  $region25: #{_lambda_.2} parent=0 // pred_fallthru
    _
  // Predicated region
  $region26: #{_lambda_.2} parent=0 // pred_check
    _
  $region27: #{_lambda_.2} parent=0 // pred_check_branch
    %1612 = sbr.rel (0) target = $region29
  $region28: #{_lambda_.2} parent=0 // pred_region
    _
  $region29: #{_lambda_.2} parent=0 // pred_fallthru
    _

// kernel: _lambda_.3
$region0: #{_lambda_.3}
  #allocation0 [shape = 'u32[]', space=smem, size = 0x4, offset = 0x4, fixed_abs, tag = 'smem constant byte address 0x4 - core index']
  #allocation1 [shape = 'u32[144,128]{1,0:T(1,128)}', space=vmem, size = 0x12000, scoped, tag = 'internal scratch']
  %s0 = inlined_call_operand.vmem [shape: bf16[128,288], index: 0, kind: input, shape index: {}]
  %s1 = inlined_call_operand.vmem [shape: bf16[128,32], index: 1, kind: input, shape index: {}]
  %s2 = inlined_call_operand.vmem [shape: bf16[288,32], index: 2, kind: input, shape index: {}]
  %s3 = inlined_call_operand.vmem [shape: f32[1,32], index: 3, kind: input, shape index: {}]
  %s4 = inlined_call_operand.vmem [shape: bf16[32,8], index: 4, kind: input, shape index: {}]
  %s5 = inlined_call_operand.vmem [shape: f32[1,8], index: 5, kind: input, shape index: {}]
  %s6 = inlined_call_operand.vmem [shape: bf16[8,32], index: 6, kind: input, shape index: {}]
  %s7 = inlined_call_operand.vmem [shape: f32[1,32], index: 7, kind: input, shape index: {}]
  %s8 = inlined_call_operand.vmem [shape: bf16[32,32], index: 8, kind: input, shape index: {}]
  %s9 = inlined_call_operand.vmem [shape: f32[1,32], index: 9, kind: input, shape index: {}]
  %s10 = inlined_call_operand.vmem [shape: bf16[32,10], index: 10, kind: input, shape index: {}]
  %s11 = inlined_call_operand.vmem [shape: f32[1,10], index: 11, kind: input, shape index: {}]
  %s12 = inlined_call_operand.hbm [shape: f32[2,10], index: 12, kind: output, shape index: {}]
  %s13 = sld [smem:[#allocation0]]
  $region58: #{_lambda_.3} parent=0
    _
  %s15 = ssub.s32 1, %s13
  %s16 = scalar_select 0, %s15, %s13
  $region1: #{_lambda_.3} parent=0
    #allocation2 [shape = 'u8[1024]{0}', space=vmem, size = 0x400, scoped, tag = 'output window, operand 0, single buffered']
    #allocation3 [shape = 's32[1]{0}', space=sflag, size = 0x4, scoped, tag = 'scoped memory for _lambda_.3']
    %17 = vsyncpa [#allocation3], 0
    // Predicated region
    $region2: #{_lambda_.3} parent=1 // pred_check
      _
    $region3: #{_lambda_.3} parent=1 // pred_check_branch
      %19 = sbr.rel (0) target = $region5
    $region4: #{_lambda_.3} parent=1 // pred_region
      _
    $region5: #{_lambda_.3} parent=1 // pred_fallthru
      _
    // Predicated region
    $region6: #{_lambda_.3} parent=1 // pred_check
      _
    $region7: #{_lambda_.3} parent=1 // pred_check_branch
      %21 = sbr.rel (0) target = $region9
    $region8: #{_lambda_.3} parent=1 // pred_region
      _
    $region9: #{_lambda_.3} parent=1 // pred_fallthru
      _
    // Predicated region
    $region10: #{_lambda_.3} parent=1 // pred_check
      _
    $region11: #{_lambda_.3} parent=1 // pred_check_branch
      %23 = sbr.rel (0) target = $region13
    $region12: #{_lambda_.3} parent=1 // pred_region
      _
    $region13: #{_lambda_.3} parent=1 // pred_fallthru
      _
    // Predicated region
    $region14: #{_lambda_.3} parent=1 // pred_check
      _
    $region15: #{_lambda_.3} parent=1 // pred_check_branch
      %25 = sbr.rel (0) target = $region17
    $region16: #{_lambda_.3} parent=1 // pred_region
      _
    $region17: #{_lambda_.3} parent=1 // pred_fallthru
      _
    // Predicated region
    $region18: #{_lambda_.3} parent=1 // pred_check
      _
    $region19: #{_lambda_.3} parent=1 // pred_check_branch
      %27 = sbr.rel (0) target = $region21
    $region20: #{_lambda_.3} parent=1 // pred_region
      _
    $region21: #{_lambda_.3} parent=1 // pred_fallthru
      _
    // Predicated region
    $region22: #{_lambda_.3} parent=1 // pred_check
      _
    $region23: #{_lambda_.3} parent=1 // pred_check_branch
      %29 = sbr.rel (0) target = $region25
    $region24: #{_lambda_.3} parent=1 // pred_region
      _
    $region25: #{_lambda_.3} parent=1 // pred_fallthru
      _
    // Predicated region
    $region26: #{_lambda_.3} parent=1 // pred_check
      _
    $region27: #{_lambda_.3} parent=1 // pred_check_branch
      %31 = sbr.rel (0) target = $region29
    $region28: #{_lambda_.3} parent=1 // pred_region
      _
    $region29: #{_lambda_.3} parent=1 // pred_fallthru
      _
    // Predicated region
    $region30: #{_lambda_.3} parent=1 // pred_check
      _
    $region31: #{_lambda_.3} parent=1 // pred_check_branch
      %33 = sbr.rel (0) target = $region33
    $region32: #{_lambda_.3} parent=1 // pred_region
      _
    $region33: #{_lambda_.3} parent=1 // pred_fallthru
      _
    // Predicated region
    $region34: #{_lambda_.3} parent=1 // pred_check
      _
    $region35: #{_lambda_.3} parent=1 // pred_check_branch
      %35 = sbr.rel (0) target = $region37
    $region36: #{_lambda_.3} parent=1 // pred_region
      _
    $region37: #{_lambda_.3} parent=1 // pred_fallthru
      _
    // Predicated region
    $region38: #{_lambda_.3} parent=1 // pred_check
      _
    $region39: #{_lambda_.3} parent=1 // pred_check_branch
      %37 = sbr.rel (0) target = $region41
    $region40: #{_lambda_.3} parent=1 // pred_region
      _
    $region41: #{_lambda_.3} parent=1 // pred_fallthru
      _
    // Predicated region
    $region42: #{_lambda_.3} parent=1 // pred_check
      _
    $region43: #{_lambda_.3} parent=1 // pred_check_branch
      %39 = sbr.rel (0) target = $region45
    $region44: #{_lambda_.3} parent=1 // pred_region
      _
    $region45: #{_lambda_.3} parent=1 // pred_fallthru
      _
    // Predicated region
    $region46: #{_lambda_.3} parent=1 // pred_check
      _
    $region47: #{_lambda_.3} parent=1 // pred_check_branch
      %41 = sbr.rel (0) target = $region49
    $region48: #{_lambda_.3} parent=1 // pred_region
      _
    $region49: #{_lambda_.3} parent=1 // pred_fallthru
      _
    %v43 = vld [vmem:[%s0] sm:$0xff]
    %v44 = vld [vmem:[%s0 + $0x8] sm:$0xf]
    %v45 = vld [vmem:[%s0 + $0xc] sm:$0xff]
    %v46 = vld [vmem:[%s0 + $0x14] sm:$0xf]
    %v47 = vld [vmem:[%s0 + $0x18] sm:$0xff]
    %v48 = vld [vmem:[%s0 + $0x20] sm:$0xf]
    %v49 = vld [vmem:[%s0 + $0x24] sm:$0xff]
    %v50 = vld [vmem:[%s0 + $0x2c] sm:$0xf]
    %v51 = vld [vmem:[%s0 + $0x30] sm:$0xff]
    %v52 = vld [vmem:[%s0 + $0x38] sm:$0xf]
    %v53 = vld [vmem:[%s0 + $0x3c] sm:$0xff]
    %v54 = vld [vmem:[%s0 + $0x44] sm:$0xf]
    %v55 = vld [vmem:[%s0 + $0x48] sm:$0xff]
    %v56 = vld [vmem:[%s0 + $0x50] sm:$0xf]
    %v57 = vld [vmem:[%s0 + $0x54] sm:$0xff]
    %v58 = vld [vmem:[%s0 + $0x5c] sm:$0xf]
    %v59 = vld [vmem:[%s0 + $0x60] sm:$0xff]
    %v60 = vld [vmem:[%s0 + $0x68] sm:$0xf]
    %v61 = vld [vmem:[%s0 + $0x6c] sm:$0xff]
    %v62 = vld [vmem:[%s0 + $0x74] sm:$0xf]
    %v63 = vld [vmem:[%s0 + $0x78] sm:$0xff]
    %v64 = vld [vmem:[%s0 + $0x80] sm:$0xf]
    %v65 = vld [vmem:[%s0 + $0x84] sm:$0xff]
    %v66 = vld [vmem:[%s0 + $0x8c] sm:$0xf]
    %v67 = vld [vmem:[%s0 + $0x90] sm:$0xff]
    %v68 = vld [vmem:[%s0 + $0x98] sm:$0xf]
    %v69 = vld [vmem:[%s0 + $0x9c] sm:$0xff]
    %v70 = vld [vmem:[%s0 + $0xa4] sm:$0xf]
    %v71 = vld [vmem:[%s0 + $0xa8] sm:$0xff]
    %v72 = vld [vmem:[%s0 + $0xb0] sm:$0xf]
    %v73 = vld [vmem:[%s0 + $0xb4] sm:$0xff]
    %v74 = vld [vmem:[%s0 + $0xbc] sm:$0xf]
    %v75 = vld [vmem:[%s2] sm:$0xf]
    %v76 = vld [vmem:[%s2 + $0x4] sm:$0xf]
    %v77 = vld [vmem:[%s2 + $0x8] sm:$0xf]
    %v78 = vld [vmem:[%s2 + $0xc] sm:$0xf]
    %v79 = vld [vmem:[%s2 + $0x10] sm:$0xf]
    %v80 = vld [vmem:[%s2 + $0x14] sm:$0xf]
    %v81 = vld [vmem:[%s2 + $0x18] sm:$0xf]
    %v82 = vld [vmem:[%s2 + $0x1c] sm:$0xf]
    %v83 = vld [vmem:[%s2 + $0x20] sm:$0xf]
    %v84 = vld [vmem:[%s2 + $0x24] sm:$0xf]
    %v85 = vld [vmem:[%s2 + $0x28] sm:$0xf]
    %v86 = vld [vmem:[%s2 + $0x2c] sm:$0xf]
    %v87 = vld [vmem:[%s2 + $0x30] sm:$0xf]
    %v88 = vld [vmem:[%s2 + $0x34] sm:$0xf]
    %v89 = vld [vmem:[%s2 + $0x38] sm:$0xf]
    %v90 = vld [vmem:[%s2 + $0x3c] sm:$0xf]
    %v91 = vld [vmem:[%s2 + $0x40] sm:$0xf]
    %v92 = vld [vmem:[%s2 + $0x44] sm:$0xf]
    %v93 = vld [vmem:[%s2 + $0x48] sm:$0xf]
    %v94 = vld [vmem:[%s2 + $0x4c] sm:$0xf]
    %v95 = vld [vmem:[%s2 + $0x50] sm:$0xf]
    %v96 = vld [vmem:[%s2 + $0x54] sm:$0xf]
    %v97 = vld [vmem:[%s2 + $0x58] sm:$0xf]
    %v98 = vld [vmem:[%s2 + $0x5c] sm:$0xf]
    %v99 = vld [vmem:[%s2 + $0x60] sm:$0xf]
    %v100 = vld [vmem:[%s2 + $0x64] sm:$0xf]
    %v101 = vld [vmem:[%s2 + $0x68] sm:$0xf]
    %v102 = vld [vmem:[%s2 + $0x6c] sm:$0xf]
    %v103 = vld [vmem:[%s2 + $0x70] sm:$0xf]
    %v104 = vld [vmem:[%s2 + $0x74] sm:$0xf]
    %v105 = vld [vmem:[%s2 + $0x78] sm:$0xf]
    %v106 = vld [vmem:[%s2 + $0x7c] sm:$0xf]
    %v107 = vld [vmem:[%s2 + $0x80] sm:$0xf]
    %v108 = vld [vmem:[%s2 + $0x84] sm:$0xf]
    %v109 = vld [vmem:[%s2 + $0x88] sm:$0xf]
    %v110 = vld [vmem:[%s2 + $0x8c] sm:$0xf]
    %v111 = vld [vmem:[%s3] sm:$0x1]
    %v113 = vlaneseq
    %v114 = vshrl.u32 %v113, 7
    %v115 = vsub.s32 0, %v114
    %v116 = vrot.slane %v111, %v115
    %v150 = vunpack.c.l.b16 %v43
    %v151 = vunpack.c.h.b16 %v43
    %v152 = vunpack.c.l.b16 %v44
    %v153 = vunpack.c.l.b16 %v45
    %v154 = vunpack.c.h.b16 %v45
    %v155 = vunpack.c.l.b16 %v46
    %v156 = vunpack.c.l.b16 %v47
    %v157 = vunpack.c.h.b16 %v47
    %v158 = vunpack.c.l.b16 %v48
    %v159 = vunpack.c.l.b16 %v49
    %v160 = vunpack.c.h.b16 %v49
    %v161 = vunpack.c.l.b16 %v50
    %v162 = vunpack.c.l.b16 %v51
    %v163 = vunpack.c.h.b16 %v51
    %v164 = vunpack.c.l.b16 %v52
    %v165 = vunpack.c.l.b16 %v53
    %v166 = vunpack.c.h.b16 %v53
    %v167 = vunpack.c.l.b16 %v54
    %v168 = vunpack.c.l.b16 %v55
    %v169 = vunpack.c.h.b16 %v55
    %v170 = vunpack.c.l.b16 %v56
    %v171 = vunpack.c.l.b16 %v57
    %v172 = vunpack.c.h.b16 %v57
    %v173 = vunpack.c.l.b16 %v58
    %v174 = vunpack.c.l.b16 %v59
    %v175 = vunpack.c.h.b16 %v59
    %v176 = vunpack.c.l.b16 %v60
    %v177 = vunpack.c.l.b16 %v61
    %v178 = vunpack.c.h.b16 %v61
    %v179 = vunpack.c.l.b16 %v62
    %v180 = vunpack.c.l.b16 %v63
    %v181 = vunpack.c.h.b16 %v63
    %v182 = vunpack.c.l.b16 %v64
    %v183 = vunpack.c.l.b16 %v65
    %v184 = vunpack.c.h.b16 %v65
    %v185 = vunpack.c.l.b16 %v66
    %v186 = vunpack.c.l.b16 %v67
    %v187 = vunpack.c.h.b16 %v67
    %v188 = vunpack.c.l.b16 %v68
    %v189 = vunpack.c.l.b16 %v69
    %v190 = vunpack.c.h.b16 %v69
    %v191 = vunpack.c.l.b16 %v70
    %v192 = vunpack.c.l.b16 %v71
    %v193 = vunpack.c.h.b16 %v71
    %v194 = vunpack.c.l.b16 %v72
    %v195 = vunpack.c.l.b16 %v73
    %v196 = vunpack.c.h.b16 %v73
    %v197 = vunpack.c.l.b16 %v74
    %v198 = vpack.c.b16 %v153, %v150
    %v199 = vpack.c.b16 %v154, %v151
    %v200 = vpack.c.b16 %v155, %v152
    %v201 = vpack.c.b16 %v159, %v156
    %v202 = vpack.c.b16 %v160, %v157
    %v203 = vpack.c.b16 %v161, %v158
    %v204 = vpack.c.b16 %v165, %v162
    %v205 = vpack.c.b16 %v166, %v163
    %v206 = vpack.c.b16 %v167, %v164
    %v207 = vpack.c.b16 %v171, %v168
    %v208 = vpack.c.b16 %v172, %v169
    %v209 = vpack.c.b16 %v173, %v170
    %v210 = vpack.c.b16 %v177, %v174
    %v211 = vpack.c.b16 %v178, %v175
    %v212 = vpack.c.b16 %v179, %v176
    %v213 = vpack.c.b16 %v183, %v180
    %v214 = vpack.c.b16 %v184, %v181
    %v215 = vpack.c.b16 %v185, %v182
    %v216 = vpack.c.b16 %v189, %v186
    %v217 = vpack.c.b16 %v190, %v187
    %v218 = vpack.c.b16 %v191, %v188
    %v219 = vpack.c.b16 %v195, %v192
    %v220 = vpack.c.b16 %v196, %v193
    %v221 = vpack.c.b16 %v197, %v194
    %v274 = vunpack.c.l.b16 %v75
    %v275 = vunpack.c.l.b16 %v76
    %v276 = vunpack.c.l.b16 %v77
    %v277 = vunpack.c.l.b16 %v78
    %v278 = vunpack.c.l.b16 %v79
    %v279 = vunpack.c.l.b16 %v80
    %v280 = vunpack.c.l.b16 %v81
    %v281 = vunpack.c.l.b16 %v82
    %v282 = vunpack.c.l.b16 %v83
    %v283 = vunpack.c.l.b16 %v84
    %v284 = vunpack.c.l.b16 %v85
    %v285 = vunpack.c.l.b16 %v86
    %v286 = vunpack.c.l.b16 %v87
    %v287 = vunpack.c.l.b16 %v88
    %v288 = vunpack.c.l.b16 %v89
    %v289 = vunpack.c.l.b16 %v90
    %v290 = vunpack.c.l.b16 %v91
    %v291 = vunpack.c.l.b16 %v92
    %v292 = vunpack.c.l.b16 %v93
    %v293 = vunpack.c.l.b16 %v94
    %v294 = vunpack.c.l.b16 %v95
    %v295 = vunpack.c.l.b16 %v96
    %v296 = vunpack.c.l.b16 %v97
    %v297 = vunpack.c.l.b16 %v98
    %v298 = vunpack.c.l.b16 %v99
    %v299 = vunpack.c.l.b16 %v100
    %v300 = vunpack.c.l.b16 %v101
    %v301 = vunpack.c.l.b16 %v102
    %v302 = vunpack.c.l.b16 %v103
    %v303 = vunpack.c.l.b16 %v104
    %v304 = vunpack.c.l.b16 %v105
    %v305 = vunpack.c.l.b16 %v106
    %v306 = vunpack.c.l.b16 %v107
    %v307 = vunpack.c.l.b16 %v108
    %v308 = vunpack.c.l.b16 %v109
    %v309 = vunpack.c.l.b16 %v110
    %v310 = vpack.c.b16 %v275, %v274
    %v311 = vpack.c.b16 %v277, %v276
    %v312 = vpack.c.b16 %v279, %v278
    %v313 = vpack.c.b16 %v281, %v280
    %v314 = vpack.c.b16 %v283, %v282
    %v315 = vpack.c.b16 %v285, %v284
    %v316 = vpack.c.b16 %v287, %v286
    %v317 = vpack.c.b16 %v289, %v288
    %v318 = vpack.c.b16 %v291, %v290
    %v319 = vpack.c.b16 %v293, %v292
    %v320 = vpack.c.b16 %v295, %v294
    %v321 = vpack.c.b16 %v297, %v296
    %v322 = vpack.c.b16 %v299, %v298
    %v323 = vpack.c.b16 %v301, %v300
    %v324 = vpack.c.b16 %v303, %v302
    %v325 = vpack.c.b16 %v305, %v304
    %v326 = vpack.c.b16 %v307, %v306
    %v327 = vpack.c.b16 %v309, %v308
    %vm346 = vcmask 261120
    %v348 = vsel %vm346, %v200, 0
    %v351 = vsel %vm346, %v203, 0
    %v354 = vsel %vm346, %v206, 0
    %v357 = vsel %vm346, %v209, 0
    %v360 = vsel %vm346, %v212, 0
    %v363 = vsel %vm346, %v215, 0
    %v366 = vsel %vm346, %v218, 0
    %v369 = vsel %vm346, %v221, 0
    %371 = vmatprep.subr.bf16.mxu0 0
    %372 = vmatpush1.bf16.msra.mxu0 %v310
    %373 = vmatprep.subr.bf16.mxu0 0
    %374 = vmatpush1.bf16.msra.mxu0 %v311
    %375 = vmatprep.subr.bf16.mxu0 0
    %376 = vmatpush1.bf16.msra.mxu0 %v312
    %377 = vmatprep.subr.bf16.mxu0 0
    %378 = vmatpush1.bf16.msra.mxu0 %v313
    %379 = vmatprep.subr.bf16.mxu0 0
    %380 = vmatpush1.bf16.msra.mxu0 %v314
    %381 = vmatprep.subr.bf16.mxu0 0
    %382 = vmatpush1.bf16.msra.mxu0 %v315
    %383 = vmatprep.subr.bf16.mxu0 0
    %384 = vmatpush1.bf16.msra.mxu0 %v316
    %385 = vmatprep.subr.bf16.mxu0 0
    %386 = vmatpush1.bf16.msra.mxu0 %v317
    %387 = vmatprep.subr.bf16.mxu0 0
    %388 = vmatpush1.bf16.msra.mxu0 %v318
    %389 = vmatprep.subr.bf16.mxu0 0
    %390 = vmatpush1.bf16.msra.mxu0 %v319
    %391 = vmatprep.subr.bf16.mxu0 0
    %392 = vmatpush1.bf16.msra.mxu0 %v320
    %393 = vmatprep.subr.bf16.mxu0 0
    %394 = vmatpush1.bf16.msra.mxu0 %v321
    %395 = vmatprep.subr.bf16.mxu0 0
    %396 = vmatpush1.bf16.msra.mxu0 %v322
    %397 = vmatprep.subr.bf16.mxu0 0
    %398 = vmatpush1.bf16.msra.mxu0 %v323
    %399 = vmatprep.subr.bf16.mxu0 0
    %400 = vmatpush1.bf16.msra.mxu0 %v324
    %401 = vmatprep.subr.bf16.mxu0 0
    %402 = vmatpush1.bf16.msra.mxu0 %v325
    %403 = vmatprep.mubr.bf16.mxu0 %v199
    %404 = vmatmul.mubr.bf16.gmra.mrb[0].mxu0 %v198
    %v405 = vpop.f32.mrb[0].mxu0
    %v406 = vadd.f32 %v116, %v405
    %v407 = vpop.f32.mrb[0].mxu0
    %v408 = vpop.f32.mrb[0].mxu0
    %v409 = vadd.f32 %v116, %v408
    %v410 = vpop.f32.mrb[0].mxu0
    %411 = vmatprep.mubr.bf16.mxu0 %v202
    %412 = vmatmul.mubr.bf16.gmra.mrb[0].mxu0 %v201
    %v413 = vpop.f32.mrb[0].mxu0
    %v414 = vadd.f32 %v116, %v413
    %v415 = vpop.f32.mrb[0].mxu0
    %v416 = vpop.f32.mrb[0].mxu0
    %v417 = vadd.f32 %v116, %v416
    %v418 = vpop.f32.mrb[0].mxu0
    %419 = vmatprep.mubr.bf16.mxu0 %v205
    %420 = vmatmul.mubr.bf16.gmra.mrb[0].mxu0 %v204
    %v421 = vpop.f32.mrb[0].mxu0
    %v422 = vadd.f32 %v116, %v421
    %v423 = vpop.f32.mrb[0].mxu0
    %v424 = vpop.f32.mrb[0].mxu0
    %v425 = vadd.f32 %v116, %v424
    %v426 = vpop.f32.mrb[0].mxu0
    %427 = vmatprep.mubr.bf16.mxu0 %v208
    %428 = vmatmul.mubr.bf16.gmra.mrb[0].mxu0 %v207
    %v429 = vpop.f32.mrb[0].mxu0
    %v430 = vadd.f32 %v116, %v429
    %v431 = vpop.f32.mrb[0].mxu0
    %v432 = vpop.f32.mrb[0].mxu0
    %v433 = vadd.f32 %v116, %v432
    %v434 = vpop.f32.mrb[0].mxu0
    %435 = vmatprep.mubr.bf16.mxu0 %v211
    %436 = vmatmul.mubr.bf16.gmra.mrb[0].mxu0 %v210
    %v437 = vpop.f32.mrb[0].mxu0
    %v438 = vadd.f32 %v116, %v437
    %v439 = vpop.f32.mrb[0].mxu0
    %v440 = vpop.f32.mrb[0].mxu0
    %v441 = vadd.f32 %v116, %v440
    %v442 = vpop.f32.mrb[0].mxu0
    %443 = vmatprep.mubr.bf16.mxu0 %v214
    %444 = vmatmul.mubr.bf16.gmra.mrb[0].mxu0 %v213
    %v445 = vpop.f32.mrb[0].mxu0
    %v446 = vadd.f32 %v116, %v445
    %v447 = vpop.f32.mrb[0].mxu0
    %v448 = vpop.f32.mrb[0].mxu0
    %v449 = vadd.f32 %v116, %v448
    %v450 = vpop.f32.mrb[0].mxu0
    %451 = vmatprep.mubr.bf16.mxu0 %v217
    %452 = vmatmul.mubr.bf16.gmra.mrb[0].mxu0 %v216
    %v453 = vpop.f32.mrb[0].mxu0
    %v454 = vadd.f32 %v116, %v453
    %v455 = vpop.f32.mrb[0].mxu0
    %v456 = vpop.f32.mrb[0].mxu0
    %v457 = vadd.f32 %v116, %v456
    %v458 = vpop.f32.mrb[0].mxu0
    %459 = vmatprep.mubr.bf16.mxu0 %v220
    %460 = vmatmul.mubr.bf16.gmra.mrb[0].mxu0 %v219
    %v461 = vpop.f32.mrb[0].mxu0
    %v462 = vadd.f32 %v116, %v461
    %v463 = vpop.f32.mrb[0].mxu0
    %v464 = vpop.f32.mrb[0].mxu0
    %v465 = vadd.f32 %v116, %v464
    %v466 = vpop.f32.mrb[0].mxu0
    %467 = vdwg.mxu0
    %468 = vmatprep.subr.bf16.mxu0 0
    %469 = vmatpush1.bf16.msra.mxu0 %v326
    %470 = vmatprep.subr.bf16.mxu0 0
    %471 = vmatpush1.bf16.msra.mxu0 %v327
    %472 = vmatprep.subr.bf16.mxu0 0
    %473 = vmatpush1.bf16.msra.mxu0 0
    %474 = vmatprep.subr.bf16.mxu0 0
    %475 = vmatpush1.bf16.msra.mxu0 0
    %476 = vmatprep.subr.bf16.mxu0 0
    %477 = vmatpush1.bf16.msra.mxu0 0
    %478 = vmatprep.subr.bf16.mxu0 0
    %479 = vmatpush1.bf16.msra.mxu0 0
    %480 = vmatprep.subr.bf16.mxu0 0
    %481 = vmatpush1.bf16.msra.mxu0 0
    %482 = vmatprep.subr.bf16.mxu0 0
    %483 = vmatpush1.bf16.msra.mxu0 0
    %484 = vmatprep.subr.bf16.mxu0 0
    %485 = vmatpush1.bf16.msra.mxu0 0
    %486 = vmatprep.subr.bf16.mxu0 0
    %487 = vmatpush1.bf16.msra.mxu0 0
    %488 = vmatprep.subr.bf16.mxu0 0
    %489 = vmatpush1.bf16.msra.mxu0 0
    %490 = vmatprep.subr.bf16.mxu0 0
    %491 = vmatpush1.bf16.msra.mxu0 0
    %492 = vmatprep.subr.bf16.mxu0 0
    %493 = vmatpush1.bf16.msra.mxu0 0
    %494 = vmatprep.subr.bf16.mxu0 0
    %495 = vmatpush1.bf16.msra.mxu0 0
    %496 = vmatprep.subr.bf16.mxu0 0
    %497 = vmatpush1.bf16.msra.mxu0 0
    %498 = vmatprep.subr.bf16.mxu0 0
    %499 = vmatpush1.bf16.msra.mxu0 0
    %500 = vmatprep.mubr.bf16.mxu0 0
    %501 = vmatmul.mubr.bf16.gmra.mrb[0].mxu0 %v348
    %v502 = vpop.f32.mrb[0].mxu0
    %v503 = vadd.f32 %v406, %v502
    %v504 = vpop.f32.mrb[0].mxu0
    %v505 = vpop.f32.mrb[0].mxu0
    %v506 = vadd.f32 %v409, %v505
    %v507 = vpop.f32.mrb[0].mxu0
    %508 = vmatprep.mubr.bf16.mxu0 0
    %509 = vmatmul.mubr.bf16.gmra.mrb[0].mxu0 %v351
    %v510 = vpop.f32.mrb[0].mxu0
    %v511 = vadd.f32 %v414, %v510
    %v512 = vpop.f32.mrb[0].mxu0
    %v513 = vpop.f32.mrb[0].mxu0
    %v514 = vadd.f32 %v417, %v513
    %v515 = vpop.f32.mrb[0].mxu0
    %516 = vmatprep.mubr.bf16.mxu0 0
    %517 = vmatmul.mubr.bf16.gmra.mrb[0].mxu0 %v354
    %v518 = vpop.f32.mrb[0].mxu0
    %v519 = vadd.f32 %v422, %v518
    %v520 = vpop.f32.mrb[0].mxu0
    %v521 = vpop.f32.mrb[0].mxu0
    %v522 = vadd.f32 %v425, %v521
    %v523 = vpop.f32.mrb[0].mxu0
    %524 = vmatprep.mubr.bf16.mxu0 0
    %525 = vmatmul.mubr.bf16.gmra.mrb[0].mxu0 %v357
    %v526 = vpop.f32.mrb[0].mxu0
    %v527 = vadd.f32 %v430, %v526
    %v528 = vpop.f32.mrb[0].mxu0
    %v529 = vpop.f32.mrb[0].mxu0
    %v530 = vadd.f32 %v433, %v529
    %v531 = vpop.f32.mrb[0].mxu0
    %532 = vmatprep.mubr.bf16.mxu0 0
    %533 = vmatmul.mubr.bf16.gmra.mrb[0].mxu0 %v360
    %v534 = vpop.f32.mrb[0].mxu0
    %v535 = vadd.f32 %v438, %v534
    %v536 = vpop.f32.mrb[0].mxu0
    %v537 = vpop.f32.mrb[0].mxu0
    %v538 = vadd.f32 %v441, %v537
    %v539 = vpop.f32.mrb[0].mxu0
    %540 = vmatprep.mubr.bf16.mxu0 0
    %541 = vmatmul.mubr.bf16.gmra.mrb[0].mxu0 %v363
    %v542 = vpop.f32.mrb[0].mxu0
    %v543 = vadd.f32 %v446, %v542
    %v544 = vpop.f32.mrb[0].mxu0
    %v545 = vpop.f32.mrb[0].mxu0
    %v546 = vadd.f32 %v449, %v545
    %v547 = vpop.f32.mrb[0].mxu0
    %548 = vmatprep.mubr.bf16.mxu0 0
    %549 = vmatmul.mubr.bf16.gmra.mrb[0].mxu0 %v366
    %v550 = vpop.f32.mrb[0].mxu0
    %v551 = vadd.f32 %v454, %v550
    %v552 = vpop.f32.mrb[0].mxu0
    %v553 = vpop.f32.mrb[0].mxu0
    %v554 = vadd.f32 %v457, %v553
    %v555 = vpop.f32.mrb[0].mxu0
    %556 = vmatprep.mubr.bf16.mxu0 0
    %557 = vmatmul.mubr.bf16.gmra.mrb[0].mxu0 %v369
    %v558 = vpop.f32.mrb[0].mxu0
    %v559 = vadd.f32 %v462, %v558
    %v560 = vpop.f32.mrb[0].mxu0
    %v561 = vpop.f32.mrb[0].mxu0
    %v562 = vadd.f32 %v465, %v561
    %v563 = vpop.f32.mrb[0].mxu0
    %564 = vdwg.mxu0
    %v565 = vmax.f32 %v503, 0.0
    %v566 = vmax.f32 %v506, 0.0
    %v567 = vmax.f32 %v511, 0.0
    %v568 = vmax.f32 %v514, 0.0
    %v569 = vmax.f32 %v519, 0.0
    %v570 = vmax.f32 %v522, 0.0
    %v571 = vmax.f32 %v527, 0.0
    %v572 = vmax.f32 %v530, 0.0
    %v573 = vmax.f32 %v535, 0.0
    %v574 = vmax.f32 %v538, 0.0
    %v575 = vmax.f32 %v543, 0.0
    %v576 = vmax.f32 %v546, 0.0
    %v577 = vmax.f32 %v551, 0.0
    %v578 = vmax.f32 %v554, 0.0
    %v579 = vmax.f32 %v559, 0.0
    %v580 = vmax.f32 %v562, 0.0
    %v581 = vsel %vm346, %v565, 0.0
    %v582 = vsel %vm346, %v566, 0.0
    %v583 = vadd.f32 %v581, %v582
    %v584 = vsel %vm346, %v567, 0.0
    %v585 = vadd.f32 %v583, %v584
    %v586 = vsel %vm346, %v568, 0.0
    %v587 = vadd.f32 %v585, %v586
    %v588 = vsel %vm346, %v569, 0.0
    %v589 = vadd.f32 %v587, %v588
    %v590 = vsel %vm346, %v570, 0.0
    %v591 = vadd.f32 %v589, %v590
    %v592 = vsel %vm346, %v571, 0.0
    %v593 = vadd.f32 %v591, %v592
    %v594 = vsel %vm346, %v572, 0.0
    %v595 = vadd.f32 %v593, %v594
    %v596 = vrot.slane %v595, 4
    %v597 = vadd.f32 %v595, %v596
    %v598 = vrot.slane %v597, 2
    %v599 = vadd.f32 %v597, %v598
    %v600 = vrot.slane %v599, 1
    %v601 = vadd.f32 %v599, %v600
    %v602 = vrcp.pop 64.0
    %v603 = vmul.f32 %v601, %v602
    %v604 = vsel %vm346, %v573, 0.0
    %v605 = vsel %vm346, %v574, 0.0
    %v606 = vadd.f32 %v604, %v605
    %v607 = vsel %vm346, %v575, 0.0
    %v608 = vadd.f32 %v606, %v607
    %v609 = vsel %vm346, %v576, 0.0
    %v610 = vadd.f32 %v608, %v609
    %v611 = vsel %vm346, %v577, 0.0
    %v612 = vadd.f32 %v610, %v611
    %v613 = vsel %vm346, %v578, 0.0
    %v614 = vadd.f32 %v612, %v613
    %v615 = vsel %vm346, %v579, 0.0
    %v616 = vadd.f32 %v614, %v615
    %v617 = vsel %vm346, %v580, 0.0
    %v618 = vadd.f32 %v616, %v617
    %v619 = vrot.slane %v618, 4
    %v620 = vadd.f32 %v618, %v619
    %v621 = vrot.slane %v620, 2
    %v622 = vadd.f32 %v620, %v621
    %v623 = vrot.slane %v622, 1
    %v624 = vadd.f32 %v622, %v623
    %v625 = vmul.f32 %v624, %v602
    %vm626 = vcmask 1040384
    %v627 = vsel %vm626, %v603, %v625
    %v628 = vpack.c.bf16 %v627, %v627
    %v629 = vld [vmem:[%s4] sm:$0xf]
    %v630 = vld [vmem:[%s4 + $0x4] sm:$0xf]
    %v631 = vld [vmem:[%s4 + $0x8] sm:$0xf]
    %v632 = vld [vmem:[%s4 + $0xc] sm:$0xf]
    %v633 = vld [vmem:[%s5] sm:$0x1]
    %v635 = vlaneseq
    %v636 = vshrl.u32 %v635, 7
    %v637 = vsub.s32 0, %v636
    %v638 = vrot.slane %v633, %v637
    %v644 = vunpack.c.l.b16 %v629
    %v645 = vunpack.c.l.b16 %v630
    %v646 = vunpack.c.l.b16 %v631
    %v647 = vunpack.c.l.b16 %v632
    %v648 = vpack.c.b16 %v645, %v644
    %v649 = vpack.c.b16 %v647, %v646
    %v653 = vsel %vm346, %v628, 0
    %655 = vmatprep.subr.bf16.mxu0 0
    %656 = vmatpush1.bf16.msra.mxu0 %v648
    %657 = vmatprep.subr.bf16.mxu0 0
    %658 = vmatpush1.bf16.msra.mxu0 %v649
    %659 = vmatprep.subr.bf16.mxu0 0
    %660 = vmatpush1.bf16.msra.mxu0 0
    %661 = vmatprep.subr.bf16.mxu0 0
    %662 = vmatpush1.bf16.msra.mxu0 0
    %663 = vmatprep.subr.bf16.mxu0 0
    %664 = vmatpush1.bf16.msra.mxu0 0
    %665 = vmatprep.subr.bf16.mxu0 0
    %666 = vmatpush1.bf16.msra.mxu0 0
    %667 = vmatprep.subr.bf16.mxu0 0
    %668 = vmatpush1.bf16.msra.mxu0 0
    %669 = vmatprep.subr.bf16.mxu0 0
    %670 = vmatpush1.bf16.msra.mxu0 0
    %671 = vmatprep.subr.bf16.mxu0 0
    %672 = vmatpush1.bf16.msra.mxu0 0
    %673 = vmatprep.subr.bf16.mxu0 0
    %674 = vmatpush1.bf16.msra.mxu0 0
    %675 = vmatprep.subr.bf16.mxu0 0
    %676 = vmatpush1.bf16.msra.mxu0 0
    %677 = vmatprep.subr.bf16.mxu0 0
    %678 = vmatpush1.bf16.msra.mxu0 0
    %679 = vmatprep.subr.bf16.mxu0 0
    %680 = vmatpush1.bf16.msra.mxu0 0
    %681 = vmatprep.subr.bf16.mxu0 0
    %682 = vmatpush1.bf16.msra.mxu0 0
    %683 = vmatprep.subr.bf16.mxu0 0
    %684 = vmatpush1.bf16.msra.mxu0 0
    %685 = vmatprep.subr.bf16.mxu0 0
    %686 = vmatpush1.bf16.msra.mxu0 0
    %687 = vmatprep.mubr.bf16.mxu0 0
    %688 = vmatmul.mubr.bf16.gmra.mrb[0].mxu0 %v653
    %v689 = vpop.f32.mrb[0].mxu0
    %v690 = vadd.f32 %v638, %v689
    %v691 = vpop.f32.mrb[0].mxu0
    %v692 = vpop.f32.mrb[0].mxu0
    %v693 = vpop.f32.mrb[0].mxu0
    %694 = vdwg.mxu0
    %v695 = vmax.f32 %v690, 0.0
    %v696 = vpack.c.bf16 %v695, %v695
    %v697 = vld [vmem:[%s6] sm:$0xf]
    %v698 = vld [vmem:[%s7] sm:$0x1]
    %v700 = vlaneseq
    %v701 = vshrl.u32 %v700, 7
    %v702 = vsub.s32 0, %v701
    %v703 = vrot.slane %v698, %v702
    %vm705 = vcmask 64512
    %v707 = vsel %vm705, %v696, 0
    %vm709 = vcmask 1043456
    %v711 = vsel %vm709, %v697, 0
    %713 = vmatprep.subr.bf16.mxu0 0
    %714 = vmatpush1.bf16.msra.mxu0 %v711
    %715 = vmatprep.subr.bf16.mxu0 0
    %716 = vmatpush1.bf16.msra.mxu0 0
    %717 = vmatprep.subr.bf16.mxu0 0
    %718 = vmatpush1.bf16.msra.mxu0 0
    %719 = vmatprep.subr.bf16.mxu0 0
    %720 = vmatpush1.bf16.msra.mxu0 0
    %721 = vmatprep.subr.bf16.mxu0 0
    %722 = vmatpush1.bf16.msra.mxu0 0
    %723 = vmatprep.subr.bf16.mxu0 0
    %724 = vmatpush1.bf16.msra.mxu0 0
    %725 = vmatprep.subr.bf16.mxu0 0
    %726 = vmatpush1.bf16.msra.mxu0 0
    %727 = vmatprep.subr.bf16.mxu0 0
    %728 = vmatpush1.bf16.msra.mxu0 0
    %729 = vmatprep.subr.bf16.mxu0 0
    %730 = vmatpush1.bf16.msra.mxu0 0
    %731 = vmatprep.subr.bf16.mxu0 0
    %732 = vmatpush1.bf16.msra.mxu0 0
    %733 = vmatprep.subr.bf16.mxu0 0
    %734 = vmatpush1.bf16.msra.mxu0 0
    %735 = vmatprep.subr.bf16.mxu0 0
    %736 = vmatpush1.bf16.msra.mxu0 0
    %737 = vmatprep.subr.bf16.mxu0 0
    %738 = vmatpush1.bf16.msra.mxu0 0
    %739 = vmatprep.subr.bf16.mxu0 0
    %740 = vmatpush1.bf16.msra.mxu0 0
    %741 = vmatprep.subr.bf16.mxu0 0
    %742 = vmatpush1.bf16.msra.mxu0 0
    %743 = vmatprep.subr.bf16.mxu0 0
    %744 = vmatpush1.bf16.msra.mxu0 0
    %745 = vmatprep.mubr.bf16.mxu0 0
    %746 = vmatmul.mubr.bf16.gmra.mrb[0].mxu0 %v707
    %v747 = vpop.f32.mrb[0].mxu0
    %v748 = vadd.f32 %v703, %v747
    %v749 = vpop.f32.mrb[0].mxu0
    %v750 = vpop.f32.mrb[0].mxu0
    %v751 = vpop.f32.mrb[0].mxu0
    %752 = vdwg.mxu0
    %v753 = vxor.u32 %v748, 2147483648
    %v754 = vmul.f32 %v753, 1.442695
    %v755 = vpow.pop %v754
    %v756 = vadd.f32 %v755, 1.0
    %v757 = vrcp.pop %v756
    %v758 = vmul.f32 1.0, %v757
    %v759 = vlaneseq
    %v760 = vshrl.u32 %v759, 7
    %v761 = vsub.s32 0, %v760
    %v762 = vrot.slane %v758, %v761
    %v763 = vmul.f32 %v565, %v762
    %v764 = vmul.f32 %v566, %v762
    %v765 = vmul.f32 %v567, %v762
    %v766 = vmul.f32 %v568, %v762
    %v767 = vmul.f32 %v569, %v762
    %v768 = vmul.f32 %v570, %v762
    %v769 = vmul.f32 %v571, %v762
    %v770 = vmul.f32 %v572, %v762
    %v771 = vlaneseq
    %v772 = vshrl.u32 %v771, 7
    %v773 = vsub.s32 1, %v772
    %v774 = vrot.slane %v758, %v773
    %v775 = vmul.f32 %v573, %v774
    %v776 = vmul.f32 %v574, %v774
    %v777 = vmul.f32 %v575, %v774
    %v778 = vmul.f32 %v576, %v774
    %v779 = vmul.f32 %v577, %v774
    %v780 = vmul.f32 %v578, %v774
    %v781 = vmul.f32 %v579, %v774
    %v782 = vmul.f32 %v580, %v774
    %v783 = vpack.c.bf16 %v764, %v763
    %v784 = vpack.c.bf16 %v766, %v765
    %v785 = vpack.c.bf16 %v768, %v767
    %v786 = vpack.c.bf16 %v770, %v769
    %v787 = vpack.c.bf16 %v776, %v775
    %v788 = vpack.c.bf16 %v778, %v777
    %v789 = vpack.c.bf16 %v780, %v779
    %v790 = vpack.c.bf16 %v782, %v781
    %v791 = vld [vmem:[%s8] sm:$0xf]
    %v792 = vld [vmem:[%s8 + $0x4] sm:$0xf]
    %v793 = vld [vmem:[%s8 + $0x8] sm:$0xf]
    %v794 = vld [vmem:[%s8 + $0xc] sm:$0xf]
    %v795 = vld [vmem:[%s9] sm:$0x1]
    %v797 = vlaneseq
    %v798 = vshrl.u32 %v797, 7
    %v799 = vsub.s32 0, %v798
    %v800 = vrot.slane %v795, %v799
    %v806 = vunpack.c.l.b16 %v791
    %v807 = vunpack.c.l.b16 %v792
    %v808 = vunpack.c.l.b16 %v793
    %v809 = vunpack.c.l.b16 %v794
    %v810 = vpack.c.b16 %v807, %v806
    %v811 = vpack.c.b16 %v809, %v808
    %v815 = vsel %vm346, %v783, 0
    %v818 = vsel %vm346, %v784, 0
    %v821 = vsel %vm346, %v785, 0
    %v824 = vsel %vm346, %v786, 0
    %v827 = vsel %vm346, %v787, 0
    %v830 = vsel %vm346, %v788, 0
    %v833 = vsel %vm346, %v789, 0
    %v836 = vsel %vm346, %v790, 0
    %838 = vmatprep.subr.bf16.mxu0 0
    %839 = vmatpush1.bf16.msra.mxu0 %v810
    %840 = vmatprep.subr.bf16.mxu0 0
    %841 = vmatpush1.bf16.msra.mxu0 %v811
    %842 = vmatprep.subr.bf16.mxu0 0
    %843 = vmatpush1.bf16.msra.mxu0 0
    %844 = vmatprep.subr.bf16.mxu0 0
    %845 = vmatpush1.bf16.msra.mxu0 0
    %846 = vmatprep.subr.bf16.mxu0 0
    %847 = vmatpush1.bf16.msra.mxu0 0
    %848 = vmatprep.subr.bf16.mxu0 0
    %849 = vmatpush1.bf16.msra.mxu0 0
    %850 = vmatprep.subr.bf16.mxu0 0
    %851 = vmatpush1.bf16.msra.mxu0 0
    %852 = vmatprep.subr.bf16.mxu0 0
    %853 = vmatpush1.bf16.msra.mxu0 0
    %854 = vmatprep.subr.bf16.mxu0 0
    %855 = vmatpush1.bf16.msra.mxu0 0
    %856 = vmatprep.subr.bf16.mxu0 0
    %857 = vmatpush1.bf16.msra.mxu0 0
    %858 = vmatprep.subr.bf16.mxu0 0
    %859 = vmatpush1.bf16.msra.mxu0 0
    %860 = vmatprep.subr.bf16.mxu0 0
    %861 = vmatpush1.bf16.msra.mxu0 0
    %862 = vmatprep.subr.bf16.mxu0 0
    %863 = vmatpush1.bf16.msra.mxu0 0
    %864 = vmatprep.subr.bf16.mxu0 0
    %865 = vmatpush1.bf16.msra.mxu0 0
    %866 = vmatprep.subr.bf16.mxu0 0
    %867 = vmatpush1.bf16.msra.mxu0 0
    %868 = vmatprep.subr.bf16.mxu0 0
    %869 = vmatpush1.bf16.msra.mxu0 0
    %870 = vmatprep.mubr.bf16.mxu0 0
    %871 = vmatmul.mubr.bf16.gmra.mrb[0].mxu0 %v815
    %v872 = vpop.f32.mrb[0].mxu0
    %v873 = vadd.f32 %v800, %v872
    %v874 = vpop.f32.mrb[0].mxu0
    %v875 = vpop.f32.mrb[0].mxu0
    %v876 = vadd.f32 %v800, %v875
    %v877 = vpop.f32.mrb[0].mxu0
    %878 = vmatprep.mubr.bf16.mxu0 0
    %879 = vmatmul.mubr.bf16.gmra.mrb[0].mxu0 %v818
    %v880 = vpop.f32.mrb[0].mxu0
    %v881 = vadd.f32 %v800, %v880
    %v882 = vpop.f32.mrb[0].mxu0
    %v883 = vpop.f32.mrb[0].mxu0
    %v884 = vadd.f32 %v800, %v883
    %v885 = vpop.f32.mrb[0].mxu0
    %886 = vmatprep.mubr.bf16.mxu0 0
    %887 = vmatmul.mubr.bf16.gmra.mrb[0].mxu0 %v821
    %v888 = vpop.f32.mrb[0].mxu0
    %v889 = vadd.f32 %v800, %v888
    %v890 = vpop.f32.mrb[0].mxu0
    %v891 = vpop.f32.mrb[0].mxu0
    %v892 = vadd.f32 %v800, %v891
    %v893 = vpop.f32.mrb[0].mxu0
    %894 = vmatprep.mubr.bf16.mxu0 0
    %895 = vmatmul.mubr.bf16.gmra.mrb[0].mxu0 %v824
    %v896 = vpop.f32.mrb[0].mxu0
    %v897 = vadd.f32 %v800, %v896
    %v898 = vpop.f32.mrb[0].mxu0
    %v899 = vpop.f32.mrb[0].mxu0
    %v900 = vadd.f32 %v800, %v899
    %v901 = vpop.f32.mrb[0].mxu0
    %902 = vmatprep.mubr.bf16.mxu0 0
    %903 = vmatmul.mubr.bf16.gmra.mrb[0].mxu0 %v827
    %v904 = vpop.f32.mrb[0].mxu0
    %v905 = vadd.f32 %v800, %v904
    %v906 = vpop.f32.mrb[0].mxu0
    %v907 = vpop.f32.mrb[0].mxu0
    %v908 = vadd.f32 %v800, %v907
    %v909 = vpop.f32.mrb[0].mxu0
    %910 = vmatprep.mubr.bf16.mxu0 0
    %911 = vmatmul.mubr.bf16.gmra.mrb[0].mxu0 %v830
    %v912 = vpop.f32.mrb[0].mxu0
    %v913 = vadd.f32 %v800, %v912
    %v914 = vpop.f32.mrb[0].mxu0
    %v915 = vpop.f32.mrb[0].mxu0
    %v916 = vadd.f32 %v800, %v915
    %v917 = vpop.f32.mrb[0].mxu0
    %918 = vmatprep.mubr.bf16.mxu0 0
    %919 = vmatmul.mubr.bf16.gmra.mrb[0].mxu0 %v833
    %v920 = vpop.f32.mrb[0].mxu0
    %v921 = vadd.f32 %v800, %v920
    %v922 = vpop.f32.mrb[0].mxu0
    %v923 = vpop.f32.mrb[0].mxu0
    %v924 = vadd.f32 %v800, %v923
    %v925 = vpop.f32.mrb[0].mxu0
    %926 = vmatprep.mubr.bf16.mxu0 0
    %927 = vmatmul.mubr.bf16.gmra.mrb[0].mxu0 %v836
    %v928 = vpop.f32.mrb[0].mxu0
    %v929 = vadd.f32 %v800, %v928
    %v930 = vpop.f32.mrb[0].mxu0
    %v931 = vpop.f32.mrb[0].mxu0
    %v932 = vadd.f32 %v800, %v931
    %v933 = vpop.f32.mrb[0].mxu0
    %934 = vdwg.mxu0
    %v935 = vld [vmem:[%s1] sm:$0xf]
    %v936 = vld [vmem:[%s1 + $0x4] sm:$0xf]
    %v937 = vld [vmem:[%s1 + $0x8] sm:$0xf]
    %v938 = vld [vmem:[%s1 + $0xc] sm:$0xf]
    %v939 = vld [vmem:[%s1 + $0x10] sm:$0xf]
    %v940 = vld [vmem:[%s1 + $0x14] sm:$0xf]
    %v941 = vld [vmem:[%s1 + $0x18] sm:$0xf]
    %v942 = vld [vmem:[%s1 + $0x1c] sm:$0xf]
    %v943 = vld [vmem:[%s1 + $0x20] sm:$0xf]
    %v944 = vld [vmem:[%s1 + $0x24] sm:$0xf]
    %v945 = vld [vmem:[%s1 + $0x28] sm:$0xf]
    %v946 = vld [vmem:[%s1 + $0x2c] sm:$0xf]
    %v947 = vld [vmem:[%s1 + $0x30] sm:$0xf]
    %v948 = vld [vmem:[%s1 + $0x34] sm:$0xf]
    %v949 = vld [vmem:[%s1 + $0x38] sm:$0xf]
    %v950 = vld [vmem:[%s1 + $0x3c] sm:$0xf]
    %v951 = vunpack.c.l.bf16 %v935
    %v952 = vunpack.c.l.bf16 %v936
    %v953 = vunpack.c.l.bf16 %v937
    %v954 = vunpack.c.l.bf16 %v938
    %v955 = vunpack.c.l.bf16 %v939
    %v956 = vunpack.c.l.bf16 %v940
    %v957 = vunpack.c.l.bf16 %v941
    %v958 = vunpack.c.l.bf16 %v942
    %v959 = vunpack.c.l.bf16 %v943
    %v960 = vunpack.c.l.bf16 %v944
    %v961 = vunpack.c.l.bf16 %v945
    %v962 = vunpack.c.l.bf16 %v946
    %v963 = vunpack.c.l.bf16 %v947
    %v964 = vunpack.c.l.bf16 %v948
    %v965 = vunpack.c.l.bf16 %v949
    %v966 = vunpack.c.l.bf16 %v950
    %v967 = vadd.f32 %v873, %v951
    %v968 = vadd.f32 %v876, %v952
    %v969 = vadd.f32 %v881, %v953
    %v970 = vadd.f32 %v884, %v954
    %v971 = vadd.f32 %v889, %v955
    %v972 = vadd.f32 %v892, %v956
    %v973 = vadd.f32 %v897, %v957
    %v974 = vadd.f32 %v900, %v958
    %v975 = vadd.f32 %v905, %v959
    %v976 = vadd.f32 %v908, %v960
    %v977 = vadd.f32 %v913, %v961
    %v978 = vadd.f32 %v916, %v962
    %v979 = vadd.f32 %v921, %v963
    %v980 = vadd.f32 %v924, %v964
    %v981 = vadd.f32 %v929, %v965
    %v982 = vadd.f32 %v932, %v966
    %v983 = vmax.f32 %v967, 0.0
    %v984 = vmax.f32 %v968, 0.0
    %v985 = vmax.f32 %v969, 0.0
    %v986 = vmax.f32 %v970, 0.0
    %v987 = vmax.f32 %v971, 0.0
    %v988 = vmax.f32 %v972, 0.0
    %v989 = vmax.f32 %v973, 0.0
    %v990 = vmax.f32 %v974, 0.0
    %v991 = vmax.f32 %v975, 0.0
    %v992 = vmax.f32 %v976, 0.0
    %v993 = vmax.f32 %v977, 0.0
    %v994 = vmax.f32 %v978, 0.0
    %v995 = vmax.f32 %v979, 0.0
    %v996 = vmax.f32 %v980, 0.0
    %v997 = vmax.f32 %v981, 0.0
    %v998 = vmax.f32 %v982, 0.0
    %v999 = vsel %vm346, %v983, 0.0
    %v1000 = vsel %vm346, %v984, 0.0
    %v1001 = vadd.f32 %v999, %v1000
    %v1002 = vsel %vm346, %v985, 0.0
    %v1003 = vadd.f32 %v1001, %v1002
    %v1004 = vsel %vm346, %v986, 0.0
    %v1005 = vadd.f32 %v1003, %v1004
    %v1006 = vsel %vm346, %v987, 0.0
    %v1007 = vadd.f32 %v1005, %v1006
    %v1008 = vsel %vm346, %v988, 0.0
    %v1009 = vadd.f32 %v1007, %v1008
    %v1010 = vsel %vm346, %v989, 0.0
    %v1011 = vadd.f32 %v1009, %v1010
    %v1012 = vsel %vm346, %v990, 0.0
    %v1013 = vadd.f32 %v1011, %v1012
    %v1014 = vrot.slane %v1013, 4
    %v1015 = vadd.f32 %v1013, %v1014
    %v1016 = vrot.slane %v1015, 2
    %v1017 = vadd.f32 %v1015, %v1016
    %v1018 = vrot.slane %v1017, 1
    %v1019 = vadd.f32 %v1017, %v1018
    %v1020 = vmul.f32 %v1019, %v602
    %v1021 = vsel %vm346, %v991, 0.0
    %v1022 = vsel %vm346, %v992, 0.0
    %v1023 = vadd.f32 %v1021, %v1022
    %v1024 = vsel %vm346, %v993, 0.0
    %v1025 = vadd.f32 %v1023, %v1024
    %v1026 = vsel %vm346, %v994, 0.0
    %v1027 = vadd.f32 %v1025, %v1026
    %v1028 = vsel %vm346, %v995, 0.0
    %v1029 = vadd.f32 %v1027, %v1028
    %v1030 = vsel %vm346, %v996, 0.0
    %v1031 = vadd.f32 %v1029, %v1030
    %v1032 = vsel %vm346, %v997, 0.0
    %v1033 = vadd.f32 %v1031, %v1032
    %v1034 = vsel %vm346, %v998, 0.0
    %v1035 = vadd.f32 %v1033, %v1034
    %v1036 = vrot.slane %v1035, 4
    %v1037 = vadd.f32 %v1035, %v1036
    %v1038 = vrot.slane %v1037, 2
    %v1039 = vadd.f32 %v1037, %v1038
    %v1040 = vrot.slane %v1039, 1
    %v1041 = vadd.f32 %v1039, %v1040
    %v1042 = vmul.f32 %v1041, %v602
    %v1043 = vsel %vm626, %v1020, %v1042
    %v1044 = vpack.c.bf16 %v1043, %v1043
    %v1045 = vld [vmem:[%s10] sm:$0xf]
    %v1046 = vld [vmem:[%s10 + $0x4] sm:$0xf]
    %v1047 = vld [vmem:[%s10 + $0x8] sm:$0xf]
    %v1048 = vld [vmem:[%s10 + $0xc] sm:$0xf]
    %v1049 = vld [vmem:[%s11] sm:$0x1]
    %v1051 = vlaneseq
    %v1052 = vshrl.u32 %v1051, 7
    %v1053 = vsub.s32 0, %v1052
    %v1054 = vrot.slane %v1049, %v1053
    %v1060 = vunpack.c.l.b16 %v1045
    %v1061 = vunpack.c.l.b16 %v1046
    %v1062 = vunpack.c.l.b16 %v1047
    %v1063 = vunpack.c.l.b16 %v1048
    %v1064 = vpack.c.b16 %v1061, %v1060
    %v1065 = vpack.c.b16 %v1063, %v1062
    %v1069 = vsel %vm346, %v1044, 0
    %1071 = vmatprep.subr.bf16.mxu0 0
    %1072 = vmatpush1.bf16.msra.mxu0 %v1064
    %1073 = vmatprep.subr.bf16.mxu0 0
    %1074 = vmatpush1.bf16.msra.mxu0 %v1065
    %1075 = vmatprep.subr.bf16.mxu0 0
    %1076 = vmatpush1.bf16.msra.mxu0 0
    %1077 = vmatprep.subr.bf16.mxu0 0
    %1078 = vmatpush1.bf16.msra.mxu0 0
    %1079 = vmatprep.subr.bf16.mxu0 0
    %1080 = vmatpush1.bf16.msra.mxu0 0
    %1081 = vmatprep.subr.bf16.mxu0 0
    %1082 = vmatpush1.bf16.msra.mxu0 0
    %1083 = vmatprep.subr.bf16.mxu0 0
    %1084 = vmatpush1.bf16.msra.mxu0 0
    %1085 = vmatprep.subr.bf16.mxu0 0
    %1086 = vmatpush1.bf16.msra.mxu0 0
    %1087 = vmatprep.subr.bf16.mxu0 0
    %1088 = vmatpush1.bf16.msra.mxu0 0
    %1089 = vmatprep.subr.bf16.mxu0 0
    %1090 = vmatpush1.bf16.msra.mxu0 0
    %1091 = vmatprep.subr.bf16.mxu0 0
    %1092 = vmatpush1.bf16.msra.mxu0 0
    %1093 = vmatprep.subr.bf16.mxu0 0
    %1094 = vmatpush1.bf16.msra.mxu0 0
    %1095 = vmatprep.subr.bf16.mxu0 0
    %1096 = vmatpush1.bf16.msra.mxu0 0
    %1097 = vmatprep.subr.bf16.mxu0 0
    %1098 = vmatpush1.bf16.msra.mxu0 0
    %1099 = vmatprep.subr.bf16.mxu0 0
    %1100 = vmatpush1.bf16.msra.mxu0 0
    %1101 = vmatprep.subr.bf16.mxu0 0
    %1102 = vmatpush1.bf16.msra.mxu0 0
    %1103 = vmatprep.mubr.bf16.mxu0 0
    %1104 = vmatmul.mubr.bf16.gmra.mrb[0].mxu0 %v1069
    %v1105 = vpop.f32.mrb[0].mxu0
    %v1106 = vadd.f32 %v1054, %v1105
    %v1107 = vpop.f32.mrb[0].mxu0
    %v1108 = vpop.f32.mrb[0].mxu0
    %v1109 = vpop.f32.mrb[0].mxu0
    %1110 = vdwg.mxu0
    %vm1111 = vcmask 74752
    %1112 = vst.msk [vmem:[#allocation2] sm:$0x3] %vm1111, %v1106
    // Predicated region
    $region50: #{_lambda_.3} parent=1 // pred_check
      _
    $region51: #{_lambda_.3} parent=1 // pred_check_branch
      %1114 = sbr.rel (0) target = $region53
    $region52: #{_lambda_.3} parent=1 // pred_region
      %s1116 = ssub.s32 32, 32
      %1117 = vsyncadd [#allocation3], %s1116
      %s1119 = sshll.u32 [#allocation2], 4
      %s1120 = int_to_ptr.vmem [resolvable:$true] %s1119
      %1122 = dma.vmem_to_hbm [thread:$0]  %s1120, 32, %s12, [#allocation3]
    $region53: #{_lambda_.3} parent=1 // pred_fallthru
      _
    // Predicated region
    $region54: #{_lambda_.3} parent=1 // pred_check
      _
    $region55: #{_lambda_.3} parent=1 // pred_check_branch
      %1124 = sbr.rel (0) target = $region57
    $region56: #{_lambda_.3} parent=1 // pred_region
      %1125 = dma.done [#allocation3], 32
    $region57: #{_lambda_.3} parent=1 // pred_fallthru
      _
    %1126 = vsyncpa [#allocation3], 1

</llo_original>
